<compile_context>
chip_gen: v6e
topology: v6e:2x2x1
jax: 0.10.0
libtpu: 0.0.40
codegen_flags: <defaults>
</compile_context>

<pallas_src>
import jax
import jax.numpy as jnp
from jax.experimental import pallas as pl
from jax.experimental.pallas import tpu as pltpu


# ----------------------------------------------------------------------------
# Fused forward kernel
# ----------------------------------------------------------------------------
def fused_forward_kernel(
        x_ref,                       # (B, 80, 1)  raw waveform, channels-last
        w1c_ref, b1c_ref,            # (3, 32),   (1, 32)    conv1 taps (Cin=1)
        w2c_ref, b2c_ref,            # (96, 64),  (1, 64)    conv2 stacked taps
        w3c_ref, b3c_ref,            # (192,128), (1, 128)   conv3 stacked taps
        w1f_ref, b1f_ref,            # (1280,256),(1, 256)   fc1 (rows pre-permuted)
        w2f_ref, b2f_ref,            # (256, 17), (1, 17)    fc2
        o_ref,                       # (B, 17)
        xp1, h1, col2, h2, col3, h3, flat):   # VMEM scratch
    B, L1, _ = x_ref.shape

    def relu_bias_pool(y, b_ref, h_ref):
        """bias + ReLU, then fused MaxPool1d(2) via strided even/odd row reads."""
        h_ref[...] = jnp.maximum(y + b_ref[...], 0.0)
        half = h_ref.shape[0] // 2
        return jnp.maximum(h_ref[pl.ds(0, half, 2), :],
                           h_ref[pl.ds(1, half, 2), :])        # (rows//2, C)

    def im2col(x3, col_ref):
        """In-kernel zero padding + im2col: lane block k holds x[l-1+k]."""
        Bc, Lp2, C3 = col_ref.shape
        Lc, Cin = Lp2 - 2, C3 // 3
        col_ref[...] = jnp.zeros_like(col_ref)                 # zero halo rows
        col_ref[:, 2:Lc + 2, 0:Cin] = x3                       # tap x[l-1]
        col_ref[:, 1:Lc + 1, Cin:2 * Cin] = x3                 # tap x[l]
        col_ref[:, 0:Lc, 2 * Cin:3 * Cin] = x3                 # tap x[l+1]
        return col_ref[:, 1:Lc + 1, :].reshape(Bc * Lc, C3)    # (B*L, 3*Cin)

    # ---- conv1 (Cin=1): 3 VPU broadcast FMAs -- skip the MXU (K would be 3) ----
    xp1[...] = jnp.zeros_like(xp1)
    xp1[:, 1:L1 + 1, :] = x_ref[...]
    t0 = xp1[:, 0:L1, :].reshape(B * L1, 1)
    t1 = xp1[:, 1:L1 + 1, :].reshape(B * L1, 1)
    t2 = xp1[:, 2:L1 + 2, :].reshape(B * L1, 1)
    w1c = w1c_ref[...]
    y1 = t0 * w1c[0:1, :] + t1 * w1c[1:2, :] + t2 * w1c[2:3, :]
    c1 = h1.shape[-1]
    p1 = relu_bias_pool(y1, b1c_ref, h1).reshape(B, L1 // 2, c1)     # (B, 40, 32)

    # ---- conv2: single im2col MXU matmul (K = 96) ----
    y2 = jnp.dot(im2col(p1, col2), w2c_ref[...],
                 preferred_element_type=jnp.float32)
    c2 = h2.shape[-1]
    p2 = relu_bias_pool(y2, b2c_ref, h2).reshape(B, L1 // 4, c2)     # (B, 20, 64)

    # ---- conv3: single im2col MXU matmul (K = 192) ----
    y3 = jnp.dot(im2col(p2, col3), w3c_ref[...],
                 preferred_element_type=jnp.float32)
    c3 = h3.shape[-1]
    p3 = relu_bias_pool(y3, b3c_ref, h3).reshape(B, L1 // 8, c3)     # (B, 10, 128)

    # ---- flatten (position-major; fc1 rows pre-permuted to match) + MLP head ----
    for l in range(L1 // 8):                      # 10 aligned 128-lane stores
        flat[:, l * c3:(l + 1) * c3] = p3[:, l, :]
    z = jnp.dot(flat[...], w1f_ref[...],
                preferred_element_type=jnp.float32) + b1f_ref[...]
    z = jnp.maximum(z, 0.0)
    o_ref[...] = jnp.dot(z, w2f_ref[...],
                         preferred_element_type=jnp.float32) + b2f_ref[...]


# ----------------------------------------------------------------------------
# Wrapper: weight re-layout only (done once, at trace time inside the jit)
# ----------------------------------------------------------------------------
@jax.jit
def pallas_forward(x_ncw, convs, fc1, fc2):
    """Full ConvClassifier forward.  x_ncw: (B, 1, 80) as in PyTorch."""
    B, _, L = x_ncw.shape
    x = x_ncw.reshape(B, L, 1).astype(jnp.float32)       # NCW (C=1) -> (B, L, 1)

    (w1, b1), (w2, b2), (w3, b3) = convs
    W1, bf1 = fc1
    W2, bf2 = fc2

    def stack_taps(w):          # torch (Cout, Cin, 3) -> (3*Cin, Cout)
        return jnp.transpose(w, (2, 1, 0)).reshape(-1, w.shape[0])

    c1, c2, c3 = w1.shape[0], w2.shape[0], w3.shape[0]   # 32, 64, 128
    L_last = L // 8                                      # 10
    # Permute fc1 rows so the kernel's position-major flatten (l*C + c) matches
    # torch's channel-major Flatten (c*L + l).  Free at trace time.
    w1p = jnp.transpose(W1.reshape(W1.shape[0], c3, L_last),
                        (2, 1, 0)).reshape(c3 * L_last, W1.shape[0])

    vmem = pl.BlockSpec(memory_space=pltpu.MemorySpace.VMEM)
    return pl.pallas_call(
        fused_forward_kernel,
        out_shape=jax.ShapeDtypeStruct((B, W2.shape[0]), jnp.float32),
        in_specs=[vmem] * 11,
        out_specs=vmem,
        scratch_shapes=[
            pltpu.VMEM((B, L + 2, 1), jnp.float32),            # conv1 padded input
            pltpu.VMEM((B * L, c1), jnp.float32),              # conv1 pre-pool
            pltpu.VMEM((B, L // 2 + 2, 3 * c1), jnp.float32),  # conv2 im2col
            pltpu.VMEM((B * (L // 2), c2), jnp.float32),       # conv2 pre-pool
            pltpu.VMEM((B, L // 4 + 2, 3 * c2), jnp.float32),  # conv3 im2col
            pltpu.VMEM((B * (L // 4), c3), jnp.float32),       # conv3 pre-pool
            pltpu.VMEM((B, c3 * L_last), jnp.float32),         # flatten buffer
        ],
    )(x,
      stack_taps(w1), b1.reshape(1, -1),
      stack_taps(w2), b2.reshape(1, -1),
      stack_taps(w3), b3.reshape(1, -1),
      w1p, bf1.reshape(1, -1),
      W2.T, bf2.reshape(1, -1))


# ----------------------------------------------------------------------------
# Pure-JAX reference (PyTorch NCW semantics) for verification
# ----------------------------------------------------------------------------
def ref_conv1d_ncw(x, w, b):
    L = x.shape[-1]
    xp = jnp.pad(x, ((0, 0), (0, 0), (1, 1)))
    y = sum(jnp.einsum('bcl,oc->bol', xp[:, :, k:k + L], w[:, :, k])
            for k in range(3))
    return y + b[None, :, None]


def ref_forward(x, convs, fc1, fc2):
    h = x
    for w, b in convs:
        h = jax.nn.relu(ref_conv1d_ncw(h, w, b))
        B, C, L = h.shape
        h = h.reshape(B, C, L // 2, 2).max(axis=3)
    h = h.reshape(h.shape[0], -1)
    W1, b1 = fc1
    W2, b2 = fc2
    h = jax.nn.relu(h @ W1.T + b1)
    return h @ W2.T + b2


# ----------------------------------------------------------------------------
# Main
# ----------------------------------------------------------------------------
if __name__ == "__main__":
    key = jax.random.PRNGKey(0)
    keys = jax.random.split(key, 11)

    def uniform(k, shape, bound):
        return jax.random.uniform(k, shape, jnp.float32, -bound, bound)

    # Deterministic parameter init (same shapes as the PyTorch module).
    convs = []
    ki = 0
    for cin, cout in [(1, 32), (32, 64), (64, 128)]:
        bound = 1.0 / (cin * 3) ** 0.5
        w = uniform(keys[ki], (cout, cin, 3), bound); ki += 1
        b = uniform(keys[ki], (cout,), bound); ki += 1
        convs.append((w, b))
    W1 = uniform(keys[ki], (256, 1280), 1.0 / 1280 ** 0.5); ki += 1
    b1 = uniform(keys[ki], (256,), 1.0 / 1280 ** 0.5); ki += 1
    W2 = uniform(keys[ki], (17, 256), 1.0 / 256 ** 0.5); ki += 1
    b2 = uniform(keys[ki], (17,), 1.0 / 256 ** 0.5); ki += 1

    # Input: batch=2, 1 channel, 80 samples (num_inputs=80 in the module).
    x = jax.random.normal(keys[ki], (2, 1, 80), jnp.float32)

    out = pallas_forward(x, convs, (W1, b1), (W2, b2))
    out = jax.block_until_ready(out)
    assert out.shape == (2, 17), out.shape

    ref = ref_forward(x, convs, (W1, b1), (W2, b2))
    if not jnp.allclose(out, ref, atol=2e-2, rtol=2e-2):
        raise AssertionError(
            f"mismatch vs reference, max abs diff = {jnp.max(jnp.abs(out - ref))}")

    print("KERNEL_OK")
</pallas_src>

<mosaic_0001>
module attributes {stable_mosaic.version = 11 : i64} {
  func.func @fused_forward_kernel(%arg0: memref<2x80x1xf32, #tpu.memory_space<vmem>>, %arg1: memref<3x32xf32, #tpu.memory_space<vmem>>, %arg2: memref<1x32xf32, #tpu.memory_space<vmem>>, %arg3: memref<96x64xf32, #tpu.memory_space<vmem>>, %arg4: memref<1x64xf32, #tpu.memory_space<vmem>>, %arg5: memref<192x128xf32, #tpu.memory_space<vmem>>, %arg6: memref<1x128xf32, #tpu.memory_space<vmem>>, %arg7: memref<1280x256xf32, #tpu.memory_space<vmem>>, %arg8: memref<1x256xf32, #tpu.memory_space<vmem>>, %arg9: memref<256x17xf32, #tpu.memory_space<vmem>>, %arg10: memref<1x17xf32, #tpu.memory_space<vmem>>, %arg11: memref<2x17xf32, #tpu.memory_space<vmem>>, %arg12: memref<2x82x1xf32, #tpu.memory_space<vmem>>, %arg13: memref<160x32xf32, #tpu.memory_space<vmem>>, %arg14: memref<2x42x96xf32, #tpu.memory_space<vmem>>, %arg15: memref<80x64xf32, #tpu.memory_space<vmem>>, %arg16: memref<2x22x192xf32, #tpu.memory_space<vmem>>, %arg17: memref<40x128xf32, #tpu.memory_space<vmem>>, %arg18: memref<2x1280xf32, #tpu.memory_space<vmem>>) attributes {dimension_semantics = [], scalar_prefetch = 0 : i64, scratch_operands = 7 : i64, tpu.core_type = #tpu.core_type<tc>} {
    %cst = arith.constant 0.000000e+00 : f32
    %0 = vector.broadcast %cst : f32 to vector<2x82x1xf32>
    %c0 = arith.constant 0 : index
    %c0_0 = arith.constant 0 : index
    %c0_1 = arith.constant 0 : index
    %1 = vector.load %arg12[%c0, %c0_0, %c0_1] : memref<2x82x1xf32, #tpu.memory_space<vmem>>, vector<2x82x1xf32>
    tpu.vector_store %arg12[%c0, %c0_0, %c0_1], %0 {strides = array<i32>} : memref<2x82x1xf32, #tpu.memory_space<vmem>>, vector<2x82x1xf32>,
    %c0_2 = arith.constant 0 : index
    %c0_3 = arith.constant 0 : index
    %c0_4 = arith.constant 0 : index
    %2 = vector.load %arg0[%c0_2, %c0_3, %c0_4] : memref<2x80x1xf32, #tpu.memory_space<vmem>>, vector<2x80x1xf32>
    %c0_5 = arith.constant 0 : index
    %c1 = arith.constant 1 : index
    %c0_6 = arith.constant 0 : index
    %3 = vector.load %arg12[%c0_5, %c1, %c0_6] : memref<2x82x1xf32, #tpu.memory_space<vmem>>, vector<2x80x1xf32>
    tpu.vector_store %arg12[%c0_5, %c1, %c0_6], %2 {strides = array<i32>} : memref<2x82x1xf32, #tpu.memory_space<vmem>>, vector<2x80x1xf32>,
    %c0_7 = arith.constant 0 : index
    %c0_8 = arith.constant 0 : index
    %c0_9 = arith.constant 0 : index
    %4 = vector.load %arg12[%c0_7, %c0_8, %c0_9] : memref<2x82x1xf32, #tpu.memory_space<vmem>>, vector<2x80x1xf32>
    %5 = vector.shape_cast %4 : vector<2x80x1xf32> to vector<160x1xf32>
    %c0_10 = arith.constant 0 : index
    %c1_11 = arith.constant 1 : index
    %c0_12 = arith.constant 0 : index
    %6 = vector.load %arg12[%c0_10, %c1_11, %c0_12] : memref<2x82x1xf32, #tpu.memory_space<vmem>>, vector<2x80x1xf32>
    %7 = vector.shape_cast %6 : vector<2x80x1xf32> to vector<160x1xf32>
    %c0_13 = arith.constant 0 : index
    %c2 = arith.constant 2 : index
    %c0_14 = arith.constant 0 : index
    %8 = vector.load %arg12[%c0_13, %c2, %c0_14] : memref<2x82x1xf32, #tpu.memory_space<vmem>>, vector<2x80x1xf32>
    %9 = vector.shape_cast %8 : vector<2x80x1xf32> to vector<160x1xf32>
    %c0_15 = arith.constant 0 : index
    %c0_16 = arith.constant 0 : index
    %10 = vector.load %arg1[%c0_15, %c0_16] : memref<3x32xf32, #tpu.memory_space<vmem>>, vector<3x32xf32>
    %11 = vector.extract_strided_slice %10 {offsets = [0, 0], sizes = [1, 32], strides = [1, 1]} : vector<3x32xf32> to vector<1x32xf32>
    %12 = vector.broadcast %5 : vector<160x1xf32> to vector<160x32xf32>
    %13 = vector.broadcast %11 : vector<1x32xf32> to vector<160x32xf32>
    %14 = arith.mulf %12, %13 : vector<160x32xf32>
    %15 = vector.extract_strided_slice %10 {offsets = [1, 0], sizes = [1, 32], strides = [1, 1]} : vector<3x32xf32> to vector<1x32xf32>
    %16 = vector.broadcast %7 : vector<160x1xf32> to vector<160x32xf32>
    %17 = vector.broadcast %15 : vector<1x32xf32> to vector<160x32xf32>
    %18 = arith.mulf %16, %17 : vector<160x32xf32>
    %19 = arith.addf %14, %18 : vector<160x32xf32>
    %20 = vector.extract_strided_slice %10 {offsets = [2, 0], sizes = [1, 32], strides = [1, 1]} : vector<3x32xf32> to vector<1x32xf32>
    %21 = vector.broadcast %9 : vector<160x1xf32> to vector<160x32xf32>
    %22 = vector.broadcast %20 : vector<1x32xf32> to vector<160x32xf32>
    %23 = arith.mulf %21, %22 : vector<160x32xf32>
    %24 = arith.addf %19, %23 : vector<160x32xf32>
    %c0_17 = arith.constant 0 : index
    %c0_18 = arith.constant 0 : index
    %25 = vector.load %arg2[%c0_17, %c0_18] : memref<1x32xf32, #tpu.memory_space<vmem>>, vector<1x32xf32>
    %26 = vector.broadcast %25 : vector<1x32xf32> to vector<160x32xf32>
    %27 = arith.addf %24, %26 : vector<160x32xf32>
    %cst_19 = arith.constant 0.000000e+00 : f32
    %28 = vector.broadcast %cst_19 : f32 to vector<160x32xf32>
    %29 = arith.maximumf %27, %28 : vector<160x32xf32>
    %c0_20 = arith.constant 0 : index
    %c0_21 = arith.constant 0 : index
    %30 = vector.load %arg13[%c0_20, %c0_21] : memref<160x32xf32, #tpu.memory_space<vmem>>, vector<160x32xf32>
    tpu.vector_store %arg13[%c0_20, %c0_21], %29 {strides = array<i32>} : memref<160x32xf32, #tpu.memory_space<vmem>>, vector<160x32xf32>,
    %c0_22 = arith.constant 0 : index
    %c0_23 = arith.constant 0 : index
    %31 = tpu.strided_load %arg13[%c0_22, %c0_23] {strides = array<i32: 2, 1>} : memref<160x32xf32, #tpu.memory_space<vmem>>, vector<80x32xf32>
    %c1_24 = arith.constant 1 : index
    %c0_25 = arith.constant 0 : index
    %32 = tpu.strided_load %arg13[%c1_24, %c0_25] {strides = array<i32: 2, 1>} : memref<160x32xf32, #tpu.memory_space<vmem>>, vector<80x32xf32>
    %33 = arith.maximumf %31, %32 : vector<80x32xf32>
    %34 = vector.shape_cast %33 : vector<80x32xf32> to vector<2x40x32xf32>
    %cst_26 = arith.constant 0.000000e+00 : f32
    %35 = vector.broadcast %cst_26 : f32 to vector<2x42x96xf32>
    %c0_27 = arith.constant 0 : index
    %c0_28 = arith.constant 0 : index
    %c0_29 = arith.constant 0 : index
    %36 = vector.load %arg14[%c0_27, %c0_28, %c0_29] : memref<2x42x96xf32, #tpu.memory_space<vmem>>, vector<2x42x96xf32>
    tpu.vector_store %arg14[%c0_27, %c0_28, %c0_29], %35 {strides = array<i32>} : memref<2x42x96xf32, #tpu.memory_space<vmem>>, vector<2x42x96xf32>,
    %c0_30 = arith.constant 0 : index
    %c2_31 = arith.constant 2 : index
    %c0_32 = arith.constant 0 : index
    %37 = vector.load %arg14[%c0_30, %c2_31, %c0_32] : memref<2x42x96xf32, #tpu.memory_space<vmem>>, vector<2x40x32xf32>
    tpu.vector_store %arg14[%c0_30, %c2_31, %c0_32], %34 {strides = array<i32>} : memref<2x42x96xf32, #tpu.memory_space<vmem>>, vector<2x40x32xf32>,
    %c0_33 = arith.constant 0 : index
    %c1_34 = arith.constant 1 : index
    %c32 = arith.constant 32 : index
    %38 = vector.load %arg14[%c0_33, %c1_34, %c32] : memref<2x42x96xf32, #tpu.memory_space<vmem>>, vector<2x40x32xf32>
    tpu.vector_store %arg14[%c0_33, %c1_34, %c32], %34 {strides = array<i32>} : memref<2x42x96xf32, #tpu.memory_space<vmem>>, vector<2x40x32xf32>,
    %c0_35 = arith.constant 0 : index
    %c0_36 = arith.constant 0 : index
    %c64 = arith.constant 64 : index
    %39 = vector.load %arg14[%c0_35, %c0_36, %c64] : memref<2x42x96xf32, #tpu.memory_space<vmem>>, vector<2x40x32xf32>
    tpu.vector_store %arg14[%c0_35, %c0_36, %c64], %34 {strides = array<i32>} : memref<2x42x96xf32, #tpu.memory_space<vmem>>, vector<2x40x32xf32>,
    %c0_37 = arith.constant 0 : index
    %c1_38 = arith.constant 1 : index
    %c0_39 = arith.constant 0 : index
    %40 = vector.load %arg14[%c0_37, %c1_38, %c0_39] : memref<2x42x96xf32, #tpu.memory_space<vmem>>, vector<2x40x96xf32>
    %41 = vector.shape_cast %40 : vector<2x40x96xf32> to vector<80x96xf32>
    %c0_40 = arith.constant 0 : index
    %c0_41 = arith.constant 0 : index
    %42 = vector.load %arg3[%c0_40, %c0_41] : memref<96x64xf32, #tpu.memory_space<vmem>>, vector<96x64xf32>
    %cst_42 = arith.constant dense<0.000000e+00> : vector<80x64xf32>
    %43 = tpu.matmul %41, %42, %cst_42 {dimension_numbers = #tpu.dot_dimension_numbers<[1], [0], [0], [1], [0, 0, 1, 1], [], []>} : vector<80x96xf32>, vector<96x64xf32>, vector<80x64xf32> -> vector<80x64xf32>
    %c0_43 = arith.constant 0 : index
    %c0_44 = arith.constant 0 : index
    %44 = vector.load %arg4[%c0_43, %c0_44] : memref<1x64xf32, #tpu.memory_space<vmem>>, vector<1x64xf32>
    %45 = vector.broadcast %44 : vector<1x64xf32> to vector<80x64xf32>
    %46 = arith.addf %43, %45 : vector<80x64xf32>
    %cst_45 = arith.constant 0.000000e+00 : f32
    %47 = vector.broadcast %cst_45 : f32 to vector<80x64xf32>
    %48 = arith.maximumf %46, %47 : vector<80x64xf32>
    %c0_46 = arith.constant 0 : index
    %c0_47 = arith.constant 0 : index
    %49 = vector.load %arg15[%c0_46, %c0_47] : memref<80x64xf32, #tpu.memory_space<vmem>>, vector<80x64xf32>
    tpu.vector_store %arg15[%c0_46, %c0_47], %48 {strides = array<i32>} : memref<80x64xf32, #tpu.memory_space<vmem>>, vector<80x64xf32>,
    %c0_48 = arith.constant 0 : index
    %c0_49 = arith.constant 0 : index
    %50 = tpu.strided_load %arg15[%c0_48, %c0_49] {strides = array<i32: 2, 1>} : memref<80x64xf32, #tpu.memory_space<vmem>>, vector<40x64xf32>
    %c1_50 = arith.constant 1 : index
    %c0_51 = arith.constant 0 : index
    %51 = tpu.strided_load %arg15[%c1_50, %c0_51] {strides = array<i32: 2, 1>} : memref<80x64xf32, #tpu.memory_space<vmem>>, vector<40x64xf32>
    %52 = arith.maximumf %50, %51 : vector<40x64xf32>
    %53 = vector.shape_cast %52 : vector<40x64xf32> to vector<2x20x64xf32>
    %cst_52 = arith.constant 0.000000e+00 : f32
    %54 = vector.broadcast %cst_52 : f32 to vector<2x22x192xf32>
    %c0_53 = arith.constant 0 : index
    %c0_54 = arith.constant 0 : index
    %c0_55 = arith.constant 0 : index
    %55 = vector.load %arg16[%c0_53, %c0_54, %c0_55] : memref<2x22x192xf32, #tpu.memory_space<vmem>>, vector<2x22x192xf32>
    tpu.vector_store %arg16[%c0_53, %c0_54, %c0_55], %54 {strides = array<i32>} : memref<2x22x192xf32, #tpu.memory_space<vmem>>, vector<2x22x192xf32>,
    %c0_56 = arith.constant 0 : index
    %c2_57 = arith.constant 2 : index
    %c0_58 = arith.constant 0 : index
    %56 = vector.load %arg16[%c0_56, %c2_57, %c0_58] : memref<2x22x192xf32, #tpu.memory_space<vmem>>, vector<2x20x64xf32>
    tpu.vector_store %arg16[%c0_56, %c2_57, %c0_58], %53 {strides = array<i32>} : memref<2x22x192xf32, #tpu.memory_space<vmem>>, vector<2x20x64xf32>,
    %c0_59 = arith.constant 0 : index
    %c1_60 = arith.constant 1 : index
    %c64_61 = arith.constant 64 : index
    %57 = vector.load %arg16[%c0_59, %c1_60, %c64_61] : memref<2x22x192xf32, #tpu.memory_space<vmem>>, vector<2x20x64xf32>
    tpu.vector_store %arg16[%c0_59, %c1_60, %c64_61], %53 {strides = array<i32>} : memref<2x22x192xf32, #tpu.memory_space<vmem>>, vector<2x20x64xf32>,
    %c0_62 = arith.constant 0 : index
    %c0_63 = arith.constant 0 : index
    %c128 = arith.constant 128 : index
    %58 = vector.load %arg16[%c0_62, %c0_63, %c128] : memref<2x22x192xf32, #tpu.memory_space<vmem>>, vector<2x20x64xf32>
    tpu.vector_store %arg16[%c0_62, %c0_63, %c128], %53 {strides = array<i32>} : memref<2x22x192xf32, #tpu.memory_space<vmem>>, vector<2x20x64xf32>,
    %c0_64 = arith.constant 0 : index
    %c1_65 = arith.constant 1 : index
    %c0_66 = arith.constant 0 : index
    %59 = vector.load %arg16[%c0_64, %c1_65, %c0_66] : memref<2x22x192xf32, #tpu.memory_space<vmem>>, vector<2x20x192xf32>
    %60 = vector.shape_cast %59 : vector<2x20x192xf32> to vector<40x192xf32>
    %c0_67 = arith.constant 0 : index
    %c0_68 = arith.constant 0 : index
    %61 = vector.load %arg5[%c0_67, %c0_68] : memref<192x128xf32, #tpu.memory_space<vmem>>, vector<192x128xf32>
    %cst_69 = arith.constant dense<0.000000e+00> : vector<40x128xf32>
    %62 = tpu.matmul %60, %61, %cst_69 {dimension_numbers = #tpu.dot_dimension_numbers<[1], [0], [0], [1], [0, 0, 1, 1], [], []>} : vector<40x192xf32>, vector<192x128xf32>, vector<40x128xf32> -> vector<40x128xf32>
    %c0_70 = arith.constant 0 : index
    %c0_71 = arith.constant 0 : index
    %63 = vector.load %arg6[%c0_70, %c0_71] : memref<1x128xf32, #tpu.memory_space<vmem>>, vector<1x128xf32>
    %64 = vector.broadcast %63 : vector<1x128xf32> to vector<40x128xf32>
    %65 = arith.addf %62, %64 : vector<40x128xf32>
    %cst_72 = arith.constant 0.000000e+00 : f32
    %66 = vector.broadcast %cst_72 : f32 to vector<40x128xf32>
    %67 = arith.maximumf %65, %66 : vector<40x128xf32>
    %c0_73 = arith.constant 0 : index
    %c0_74 = arith.constant 0 : index
    %68 = vector.load %arg17[%c0_73, %c0_74] : memref<40x128xf32, #tpu.memory_space<vmem>>, vector<40x128xf32>
    tpu.vector_store %arg17[%c0_73, %c0_74], %67 {strides = array<i32>} : memref<40x128xf32, #tpu.memory_space<vmem>>, vector<40x128xf32>,
    %c0_75 = arith.constant 0 : index
    %c0_76 = arith.constant 0 : index
    %69 = tpu.strided_load %arg17[%c0_75, %c0_76] {strides = array<i32: 2, 1>} : memref<40x128xf32, #tpu.memory_space<vmem>>, vector<20x128xf32>
    %c1_77 = arith.constant 1 : index
    %c0_78 = arith.constant 0 : index
    %70 = tpu.strided_load %arg17[%c1_77, %c0_78] {strides = array<i32: 2, 1>} : memref<40x128xf32, #tpu.memory_space<vmem>>, vector<20x128xf32>
    %71 = arith.maximumf %69, %70 : vector<20x128xf32>
    %72 = vector.shape_cast %71 : vector<20x128xf32> to vector<2x10x128xf32>
    %73 = vector.extract_strided_slice %72 {offsets = [0, 0, 0], sizes = [2, 1, 128], strides = [1, 1, 1]} : vector<2x10x128xf32> to vector<2x1x128xf32>
    %74 = vector.shape_cast %73 : vector<2x1x128xf32> to vector<2x128xf32>
    %c0_79 = arith.constant 0 : index
    %c0_80 = arith.constant 0 : index
    %75 = vector.load %arg18[%c0_79, %c0_80] : memref<2x1280xf32, #tpu.memory_space<vmem>>, vector<2x128xf32>
    tpu.vector_store %arg18[%c0_79, %c0_80], %74 {strides = array<i32>} : memref<2x1280xf32, #tpu.memory_space<vmem>>, vector<2x128xf32>,
    %76 = vector.extract_strided_slice %72 {offsets = [0, 1, 0], sizes = [2, 1, 128], strides = [1, 1, 1]} : vector<2x10x128xf32> to vector<2x1x128xf32>
    %77 = vector.shape_cast %76 : vector<2x1x128xf32> to vector<2x128xf32>
    %c0_81 = arith.constant 0 : index
    %c128_82 = arith.constant 128 : index
    %78 = vector.load %arg18[%c0_81, %c128_82] : memref<2x1280xf32, #tpu.memory_space<vmem>>, vector<2x128xf32>
    tpu.vector_store %arg18[%c0_81, %c128_82], %77 {strides = array<i32>} : memref<2x1280xf32, #tpu.memory_space<vmem>>, vector<2x128xf32>,
    %79 = vector.extract_strided_slice %72 {offsets = [0, 2, 0], sizes = [2, 1, 128], strides = [1, 1, 1]} : vector<2x10x128xf32> to vector<2x1x128xf32>
    %80 = vector.shape_cast %79 : vector<2x1x128xf32> to vector<2x128xf32>
    %c0_83 = arith.constant 0 : index
    %c256 = arith.constant 256 : index
    %81 = vector.load %arg18[%c0_83, %c256] : memref<2x1280xf32, #tpu.memory_space<vmem>>, vector<2x128xf32>
    tpu.vector_store %arg18[%c0_83, %c256], %80 {strides = array<i32>} : memref<2x1280xf32, #tpu.memory_space<vmem>>, vector<2x128xf32>,
    %82 = vector.extract_strided_slice %72 {offsets = [0, 3, 0], sizes = [2, 1, 128], strides = [1, 1, 1]} : vector<2x10x128xf32> to vector<2x1x128xf32>
    %83 = vector.shape_cast %82 : vector<2x1x128xf32> to vector<2x128xf32>
    %c0_84 = arith.constant 0 : index
    %c384 = arith.constant 384 : index
    %84 = vector.load %arg18[%c0_84, %c384] : memref<2x1280xf32, #tpu.memory_space<vmem>>, vector<2x128xf32>
    tpu.vector_store %arg18[%c0_84, %c384], %83 {strides = array<i32>} : memref<2x1280xf32, #tpu.memory_space<vmem>>, vector<2x128xf32>,
    %85 = vector.extract_strided_slice %72 {offsets = [0, 4, 0], sizes = [2, 1, 128], strides = [1, 1, 1]} : vector<2x10x128xf32> to vector<2x1x128xf32>
    %86 = vector.shape_cast %85 : vector<2x1x128xf32> to vector<2x128xf32>
    %c0_85 = arith.constant 0 : index
    %c512 = arith.constant 512 : index
    %87 = vector.load %arg18[%c0_85, %c512] : memref<2x1280xf32, #tpu.memory_space<vmem>>, vector<2x128xf32>
    tpu.vector_store %arg18[%c0_85, %c512], %86 {strides = array<i32>} : memref<2x1280xf32, #tpu.memory_space<vmem>>, vector<2x128xf32>,
    %88 = vector.extract_strided_slice %72 {offsets = [0, 5, 0], sizes = [2, 1, 128], strides = [1, 1, 1]} : vector<2x10x128xf32> to vector<2x1x128xf32>
    %89 = vector.shape_cast %88 : vector<2x1x128xf32> to vector<2x128xf32>
    %c0_86 = arith.constant 0 : index
    %c640 = arith.constant 640 : index
    %90 = vector.load %arg18[%c0_86, %c640] : memref<2x1280xf32, #tpu.memory_space<vmem>>, vector<2x128xf32>
    tpu.vector_store %arg18[%c0_86, %c640], %89 {strides = array<i32>} : memref<2x1280xf32, #tpu.memory_space<vmem>>, vector<2x128xf32>,
    %91 = vector.extract_strided_slice %72 {offsets = [0, 6, 0], sizes = [2, 1, 128], strides = [1, 1, 1]} : vector<2x10x128xf32> to vector<2x1x128xf32>
    %92 = vector.shape_cast %91 : vector<2x1x128xf32> to vector<2x128xf32>
    %c0_87 = arith.constant 0 : index
    %c768 = arith.constant 768 : index
    %93 = vector.load %arg18[%c0_87, %c768] : memref<2x1280xf32, #tpu.memory_space<vmem>>, vector<2x128xf32>
    tpu.vector_store %arg18[%c0_87, %c768], %92 {strides = array<i32>} : memref<2x1280xf32, #tpu.memory_space<vmem>>, vector<2x128xf32>,
    %94 = vector.extract_strided_slice %72 {offsets = [0, 7, 0], sizes = [2, 1, 128], strides = [1, 1, 1]} : vector<2x10x128xf32> to vector<2x1x128xf32>
    %95 = vector.shape_cast %94 : vector<2x1x128xf32> to vector<2x128xf32>
    %c0_88 = arith.constant 0 : index
    %c896 = arith.constant 896 : index
    %96 = vector.load %arg18[%c0_88, %c896] : memref<2x1280xf32, #tpu.memory_space<vmem>>, vector<2x128xf32>
    tpu.vector_store %arg18[%c0_88, %c896], %95 {strides = array<i32>} : memref<2x1280xf32, #tpu.memory_space<vmem>>, vector<2x128xf32>,
    %97 = vector.extract_strided_slice %72 {offsets = [0, 8, 0], sizes = [2, 1, 128], strides = [1, 1, 1]} : vector<2x10x128xf32> to vector<2x1x128xf32>
    %98 = vector.shape_cast %97 : vector<2x1x128xf32> to vector<2x128xf32>
    %c0_89 = arith.constant 0 : index
    %c1024 = arith.constant 1024 : index
    %99 = vector.load %arg18[%c0_89, %c1024] : memref<2x1280xf32, #tpu.memory_space<vmem>>, vector<2x128xf32>
    tpu.vector_store %arg18[%c0_89, %c1024], %98 {strides = array<i32>} : memref<2x1280xf32, #tpu.memory_space<vmem>>, vector<2x128xf32>,
    %100 = vector.extract_strided_slice %72 {offsets = [0, 9, 0], sizes = [2, 1, 128], strides = [1, 1, 1]} : vector<2x10x128xf32> to vector<2x1x128xf32>
    %101 = vector.shape_cast %100 : vector<2x1x128xf32> to vector<2x128xf32>
    %c0_90 = arith.constant 0 : index
    %c1152 = arith.constant 1152 : index
    %102 = vector.load %arg18[%c0_90, %c1152] : memref<2x1280xf32, #tpu.memory_space<vmem>>, vector<2x128xf32>
    tpu.vector_store %arg18[%c0_90, %c1152], %101 {strides = array<i32>} : memref<2x1280xf32, #tpu.memory_space<vmem>>, vector<2x128xf32>,
    %c0_91 = arith.constant 0 : index
    %c0_92 = arith.constant 0 : index
    %103 = vector.load %arg18[%c0_91, %c0_92] : memref<2x1280xf32, #tpu.memory_space<vmem>>, vector<2x1280xf32>
    %c0_93 = arith.constant 0 : index
    %c0_94 = arith.constant 0 : index
    %104 = vector.load %arg7[%c0_93, %c0_94] : memref<1280x256xf32, #tpu.memory_space<vmem>>, vector<1280x256xf32>
    %cst_95 = arith.constant dense<0.000000e+00> : vector<2x256xf32>
    %105 = tpu.matmul %103, %104, %cst_95 {dimension_numbers = #tpu.dot_dimension_numbers<[1], [0], [0], [1], [0, 0, 1, 1], [], []>} : vector<2x1280xf32>, vector<1280x256xf32>, vector<2x256xf32> -> vector<2x256xf32>
    %c0_96 = arith.constant 0 : index
    %c0_97 = arith.constant 0 : index
    %106 = vector.load %arg8[%c0_96, %c0_97] : memref<1x256xf32, #tpu.memory_space<vmem>>, vector<1x256xf32>
    %107 = vector.broadcast %106 : vector<1x256xf32> to vector<2x256xf32>
    %108 = arith.addf %105, %107 : vector<2x256xf32>
    %cst_98 = arith.constant 0.000000e+00 : f32
    %109 = vector.broadcast %cst_98 : f32 to vector<2x256xf32>
    %110 = arith.maximumf %108, %109 : vector<2x256xf32>
    %c0_99 = arith.constant 0 : index
    %c0_100 = arith.constant 0 : index
    %111 = vector.load %arg9[%c0_99, %c0_100] : memref<256x17xf32, #tpu.memory_space<vmem>>, vector<256x17xf32>
    %cst_101 = arith.constant dense<0.000000e+00> : vector<2x17xf32>
    %112 = tpu.matmul %110, %111, %cst_101 {dimension_numbers = #tpu.dot_dimension_numbers<[1], [0], [0], [1], [0, 0, 1, 1], [], []>} : vector<2x256xf32>, vector<256x17xf32>, vector<2x17xf32> -> vector<2x17xf32>
    %c0_102 = arith.constant 0 : index
    %c0_103 = arith.constant 0 : index
    %113 = vector.load %arg10[%c0_102, %c0_103] : memref<1x17xf32, #tpu.memory_space<vmem>>, vector<1x17xf32>
    %114 = vector.broadcast %113 : vector<1x17xf32> to vector<2x17xf32>
    %115 = arith.addf %112, %114 : vector<2x17xf32>
    %c0_104 = arith.constant 0 : index
    %c0_105 = arith.constant 0 : index
    %116 = vector.load %arg11[%c0_104, %c0_105] : memref<2x17xf32, #tpu.memory_space<vmem>>, vector<2x17xf32>
    tpu.vector_store %arg11[%c0_104, %c0_105], %115 {strides = array<i32>} : memref<2x17xf32, #tpu.memory_space<vmem>>, vector<2x17xf32>,
    return
  }
}

</mosaic_0001>

<llo_original>
// kernel: pallas_forward.1
$region0: #{pallas_forward.1}
  #allocation0 [shape = 'u32[]', space=smem, size = 0x4, offset = 0x4, fixed_abs, tag = 'smem constant byte address 0x4 - core index']
  #allocation1 [shape = 'u32[144,128]{1,0:T(1,128)}', space=vmem, size = 0x12000, scoped, tag = 'internal scratch']
  #allocation2 [shape = 'f32[2,82,1]{2,1,0:T(8,128)}', space=vmem, size = 0x16000, scoped, tag = 'scratch operand']
  #allocation3 [shape = 'f32[160,32]{1,0:T(8,128)}', space=vmem, size = 0x14000, scoped, tag = 'scratch operand']
  #allocation4 [shape = 'f32[2,42,96]{2,1,0:T(8,128)}', space=vmem, size = 0xc000, scoped, tag = 'scratch operand']
  #allocation5 [shape = 'f32[80,64]{1,0:T(8,128)}', space=vmem, size = 0xa000, scoped, tag = 'scratch operand']
  #allocation6 [shape = 'f32[2,22,192]{2,1,0:T(8,128)}', space=vmem, size = 0xc000, scoped, tag = 'scratch operand']
  #allocation7 [shape = 'f32[40,128]{1,0:T(8,128)}', space=vmem, size = 0x5000, scoped, tag = 'scratch operand']
  #allocation8 [shape = 'f32[2,1280]{1,0:T(2,128)}', space=vmem, size = 0x2800, scoped, tag = 'scratch operand']
  %s0 = inlined_call_operand.vmem [shape: f32[2,80,1], index: 0, kind: input, shape index: {}]
  %s1 = inlined_call_operand.vmem [shape: f32[3,32], index: 1, kind: input, shape index: {}]
  %s2 = inlined_call_operand.vmem [shape: f32[1,32], index: 2, kind: input, shape index: {}]
  %s3 = inlined_call_operand.vmem [shape: f32[96,64], index: 3, kind: input, shape index: {}]
  %s4 = inlined_call_operand.vmem [shape: f32[1,64], index: 4, kind: input, shape index: {}]
  %s5 = inlined_call_operand.vmem [shape: f32[192,128], index: 5, kind: input, shape index: {}]
  %s6 = inlined_call_operand.vmem [shape: f32[1,128], index: 6, kind: input, shape index: {}]
  %s7 = inlined_call_operand.vmem [shape: f32[1280,256], index: 7, kind: input, shape index: {}]
  %s8 = inlined_call_operand.vmem [shape: f32[1,256], index: 8, kind: input, shape index: {}]
  %s9 = inlined_call_operand.vmem [shape: f32[256,17], index: 9, kind: input, shape index: {}]
  %s10 = inlined_call_operand.vmem [shape: f32[1,17], index: 10, kind: input, shape index: {}]
  %s11 = inlined_call_operand.hbm [shape: f32[2,17], index: 11, kind: output, shape index: {}]
  %s12 = sld [smem:[#allocation0]]
  $region54: #{pallas_forward.1} parent=0
    _
  %s14 = ssub.s32 1, %s12
  %s15 = scalar_select 0, %s14, %s12
  $region1: #{pallas_forward.1} parent=0
    #allocation9 [shape = 'u8[1024]{0}', space=vmem, size = 0x400, scoped, tag = 'output window, operand 0, single buffered']
    #allocation10 [shape = 's32[1]{0}', space=sflag, size = 0x4, scoped, tag = 'scoped memory for pallas_forward.1']
    %16 = vsyncpa [#allocation10], 0
    // Predicated region
    $region2: #{pallas_forward.1} parent=1 // pred_check
      _
    $region3: #{pallas_forward.1} parent=1 // pred_check_branch
      %18 = sbr.rel (0) target = $region5
    $region4: #{pallas_forward.1} parent=1 // pred_region
      _
    $region5: #{pallas_forward.1} parent=1 // pred_fallthru
      _
    // Predicated region
    $region6: #{pallas_forward.1} parent=1 // pred_check
      _
    $region7: #{pallas_forward.1} parent=1 // pred_check_branch
      %20 = sbr.rel (0) target = $region9
    $region8: #{pallas_forward.1} parent=1 // pred_region
      _
    $region9: #{pallas_forward.1} parent=1 // pred_fallthru
      _
    // Predicated region
    $region10: #{pallas_forward.1} parent=1 // pred_check
      _
    $region11: #{pallas_forward.1} parent=1 // pred_check_branch
      %22 = sbr.rel (0) target = $region13
    $region12: #{pallas_forward.1} parent=1 // pred_region
      _
    $region13: #{pallas_forward.1} parent=1 // pred_fallthru
      _
    // Predicated region
    $region14: #{pallas_forward.1} parent=1 // pred_check
      _
    $region15: #{pallas_forward.1} parent=1 // pred_check_branch
      %24 = sbr.rel (0) target = $region17
    $region16: #{pallas_forward.1} parent=1 // pred_region
      _
    $region17: #{pallas_forward.1} parent=1 // pred_fallthru
      _
    // Predicated region
    $region18: #{pallas_forward.1} parent=1 // pred_check
      _
    $region19: #{pallas_forward.1} parent=1 // pred_check_branch
      %26 = sbr.rel (0) target = $region21
    $region20: #{pallas_forward.1} parent=1 // pred_region
      _
    $region21: #{pallas_forward.1} parent=1 // pred_fallthru
      _
    // Predicated region
    $region22: #{pallas_forward.1} parent=1 // pred_check
      _
    $region23: #{pallas_forward.1} parent=1 // pred_check_branch
      %28 = sbr.rel (0) target = $region25
    $region24: #{pallas_forward.1} parent=1 // pred_region
      _
    $region25: #{pallas_forward.1} parent=1 // pred_fallthru
      _
    // Predicated region
    $region26: #{pallas_forward.1} parent=1 // pred_check
      _
    $region27: #{pallas_forward.1} parent=1 // pred_check_branch
      %30 = sbr.rel (0) target = $region29
    $region28: #{pallas_forward.1} parent=1 // pred_region
      _
    $region29: #{pallas_forward.1} parent=1 // pred_fallthru
      _
    // Predicated region
    $region30: #{pallas_forward.1} parent=1 // pred_check
      _
    $region31: #{pallas_forward.1} parent=1 // pred_check_branch
      %32 = sbr.rel (0) target = $region33
    $region32: #{pallas_forward.1} parent=1 // pred_region
      _
    $region33: #{pallas_forward.1} parent=1 // pred_fallthru
      _
    // Predicated region
    $region34: #{pallas_forward.1} parent=1 // pred_check
      _
    $region35: #{pallas_forward.1} parent=1 // pred_check_branch
      %34 = sbr.rel (0) target = $region37
    $region36: #{pallas_forward.1} parent=1 // pred_region
      _
    $region37: #{pallas_forward.1} parent=1 // pred_fallthru
      _
    // Predicated region
    $region38: #{pallas_forward.1} parent=1 // pred_check
      _
    $region39: #{pallas_forward.1} parent=1 // pred_check_branch
      %36 = sbr.rel (0) target = $region41
    $region40: #{pallas_forward.1} parent=1 // pred_region
      _
    $region41: #{pallas_forward.1} parent=1 // pred_fallthru
      _
    // Predicated region
    $region42: #{pallas_forward.1} parent=1 // pred_check
      _
    $region43: #{pallas_forward.1} parent=1 // pred_check_branch
      %38 = sbr.rel (0) target = $region45
    $region44: #{pallas_forward.1} parent=1 // pred_region
      _
    $region45: #{pallas_forward.1} parent=1 // pred_fallthru
      _
    %vm39 = vcmask 7168
    %40 = vst.msk [vmem:[#allocation2] sm:$0xff] %vm39, 0.0
    %41 = vst.msk [vmem:[#allocation2 + $0x8] sm:$0xff] %vm39, 0.0
    %42 = vst.msk [vmem:[#allocation2 + $0x10] sm:$0xff] %vm39, 0.0
    %43 = vst.msk [vmem:[#allocation2 + $0x18] sm:$0xff] %vm39, 0.0
    %44 = vst.msk [vmem:[#allocation2 + $0x20] sm:$0xff] %vm39, 0.0
    %45 = vst.msk [vmem:[#allocation2 + $0x28] sm:$0xff] %vm39, 0.0
    %46 = vst.msk [vmem:[#allocation2 + $0x30] sm:$0xff] %vm39, 0.0
    %47 = vst.msk [vmem:[#allocation2 + $0x38] sm:$0xff] %vm39, 0.0
    %48 = vst.msk [vmem:[#allocation2 + $0x40] sm:$0xff] %vm39, 0.0
    %49 = vst.msk [vmem:[#allocation2 + $0x48] sm:$0xff] %vm39, 0.0
    %vm50 = vcmask 1024
    %51 = vst.msk [vmem:[#allocation2 + $0x50] sm:$0x3] %vm50, 0.0
    %52 = vst.msk [vmem:[#allocation2 + $0x58] sm:$0xff] %vm39, 0.0
    %53 = vst.msk [vmem:[#allocation2 + $0x60] sm:$0xff] %vm39, 0.0
    %54 = vst.msk [vmem:[#allocation2 + $0x68] sm:$0xff] %vm39, 0.0
    %55 = vst.msk [vmem:[#allocation2 + $0x70] sm:$0xff] %vm39, 0.0
    %56 = vst.msk [vmem:[#allocation2 + $0x78] sm:$0xff] %vm39, 0.0
    %57 = vst.msk [vmem:[#allocation2 + $0x80] sm:$0xff] %vm39, 0.0
    %58 = vst.msk [vmem:[#allocation2 + $0x88] sm:$0xff] %vm39, 0.0
    %59 = vst.msk [vmem:[#allocation2 + $0x90] sm:$0xff] %vm39, 0.0
    %60 = vst.msk [vmem:[#allocation2 + $0x98] sm:$0xff] %vm39, 0.0
    %61 = vst.msk [vmem:[#allocation2 + $0xa0] sm:$0xff] %vm39, 0.0
    %62 = vst.msk [vmem:[#allocation2 + $0xa8] sm:$0x3] %vm50, 0.0
    %v63 = vld [vmem:[%s0] sm:$0xff]
    %v64 = vld [vmem:[%s0 + $0x8] sm:$0xff]
    %v65 = vld [vmem:[%s0 + $0x10] sm:$0xff]
    %v66 = vld [vmem:[%s0 + $0x18] sm:$0xff]
    %v67 = vld [vmem:[%s0 + $0x20] sm:$0xff]
    %v68 = vld [vmem:[%s0 + $0x28] sm:$0xff]
    %v69 = vld [vmem:[%s0 + $0x30] sm:$0xff]
    %v70 = vld [vmem:[%s0 + $0x38] sm:$0xff]
    %v71 = vld [vmem:[%s0 + $0x40] sm:$0xff]
    %v72 = vld [vmem:[%s0 + $0x48] sm:$0xff]
    %v73 = vld [vmem:[%s0 + $0x50] sm:$0xff]
    %v74 = vld [vmem:[%s0 + $0x58] sm:$0xff]
    %v75 = vld [vmem:[%s0 + $0x60] sm:$0xff]
    %v76 = vld [vmem:[%s0 + $0x68] sm:$0xff]
    %v77 = vld [vmem:[%s0 + $0x70] sm:$0xff]
    %v78 = vld [vmem:[%s0 + $0x78] sm:$0xff]
    %v79 = vld [vmem:[%s0 + $0x80] sm:$0xff]
    %v80 = vld [vmem:[%s0 + $0x88] sm:$0xff]
    %v81 = vld [vmem:[%s0 + $0x90] sm:$0xff]
    %v82 = vld [vmem:[%s0 + $0x98] sm:$0xff]
    %83 = vst.msk [vmem:[#allocation2 + $0x1] sm:$0xff] %vm39, %v63
    %84 = vst.msk [vmem:[#allocation2 + $0x9] sm:$0xff] %vm39, %v64
    %85 = vst.msk [vmem:[#allocation2 + $0x11] sm:$0xff] %vm39, %v65
    %86 = vst.msk [vmem:[#allocation2 + $0x19] sm:$0xff] %vm39, %v66
    %87 = vst.msk [vmem:[#allocation2 + $0x21] sm:$0xff] %vm39, %v67
    %88 = vst.msk [vmem:[#allocation2 + $0x29] sm:$0xff] %vm39, %v68
    %89 = vst.msk [vmem:[#allocation2 + $0x31] sm:$0xff] %vm39, %v69
    %90 = vst.msk [vmem:[#allocation2 + $0x39] sm:$0xff] %vm39, %v70
    %91 = vst.msk [vmem:[#allocation2 + $0x41] sm:$0xff] %vm39, %v71
    %92 = vst.msk [vmem:[#allocation2 + $0x49] sm:$0xff] %vm39, %v72
    %93 = vst.msk [vmem:[#allocation2 + $0x59] sm:$0xff] %vm39, %v73
    %94 = vst.msk [vmem:[#allocation2 + $0x61] sm:$0xff] %vm39, %v74
    %95 = vst.msk [vmem:[#allocation2 + $0x69] sm:$0xff] %vm39, %v75
    %96 = vst.msk [vmem:[#allocation2 + $0x71] sm:$0xff] %vm39, %v76
    %97 = vst.msk [vmem:[#allocation2 + $0x79] sm:$0xff] %vm39, %v77
    %98 = vst.msk [vmem:[#allocation2 + $0x81] sm:$0xff] %vm39, %v78
    %99 = vst.msk [vmem:[#allocation2 + $0x89] sm:$0xff] %vm39, %v79
    %100 = vst.msk [vmem:[#allocation2 + $0x91] sm:$0xff] %vm39, %v80
    %101 = vst.msk [vmem:[#allocation2 + $0x99] sm:$0xff] %vm39, %v81
    %102 = vst.msk [vmem:[#allocation2 + $0xa1] sm:$0xff] %vm39, %v82
    %v103 = vld [vmem:[#allocation2] sm:$0xff]
    %v104 = vld [vmem:[#allocation2 + $0x8] sm:$0xff]
    %v105 = vld [vmem:[#allocation2 + $0x10] sm:$0xff]
    %v106 = vld [vmem:[#allocation2 + $0x18] sm:$0xff]
    %v107 = vld [vmem:[#allocation2 + $0x20] sm:$0xff]
    %v108 = vld [vmem:[#allocation2 + $0x28] sm:$0xff]
    %v109 = vld [vmem:[#allocation2 + $0x30] sm:$0xff]
    %v110 = vld [vmem:[#allocation2 + $0x38] sm:$0xff]
    %v111 = vld [vmem:[#allocation2 + $0x40] sm:$0xff]
    %v112 = vld [vmem:[#allocation2 + $0x48] sm:$0xff]
    %v113 = vld [vmem:[#allocation2 + $0x58] sm:$0xff]
    %v114 = vld [vmem:[#allocation2 + $0x60] sm:$0xff]
    %v115 = vld [vmem:[#allocation2 + $0x68] sm:$0xff]
    %v116 = vld [vmem:[#allocation2 + $0x70] sm:$0xff]
    %v117 = vld [vmem:[#allocation2 + $0x78] sm:$0xff]
    %v118 = vld [vmem:[#allocation2 + $0x80] sm:$0xff]
    %v119 = vld [vmem:[#allocation2 + $0x88] sm:$0xff]
    %v120 = vld [vmem:[#allocation2 + $0x90] sm:$0xff]
    %v121 = vld [vmem:[#allocation2 + $0x98] sm:$0xff]
    %v122 = vld [vmem:[#allocation2 + $0xa0] sm:$0xff]
    %v123 = vld [vmem:[#allocation2 + $0x1] sm:$0xff]
    %v124 = vld [vmem:[#allocation2 + $0x9] sm:$0xff]
    %v125 = vld [vmem:[#allocation2 + $0x11] sm:$0xff]
    %v126 = vld [vmem:[#allocation2 + $0x19] sm:$0xff]
    %v127 = vld [vmem:[#allocation2 + $0x21] sm:$0xff]
    %v128 = vld [vmem:[#allocation2 + $0x29] sm:$0xff]
    %v129 = vld [vmem:[#allocation2 + $0x31] sm:$0xff]
    %v130 = vld [vmem:[#allocation2 + $0x39] sm:$0xff]
    %v131 = vld [vmem:[#allocation2 + $0x41] sm:$0xff]
    %v132 = vld [vmem:[#allocation2 + $0x49] sm:$0xff]
    %v133 = vld [vmem:[#allocation2 + $0x59] sm:$0xff]
    %v134 = vld [vmem:[#allocation2 + $0x61] sm:$0xff]
    %v135 = vld [vmem:[#allocation2 + $0x69] sm:$0xff]
    %v136 = vld [vmem:[#allocation2 + $0x71] sm:$0xff]
    %v137 = vld [vmem:[#allocation2 + $0x79] sm:$0xff]
    %v138 = vld [vmem:[#allocation2 + $0x81] sm:$0xff]
    %v139 = vld [vmem:[#allocation2 + $0x89] sm:$0xff]
    %v140 = vld [vmem:[#allocation2 + $0x91] sm:$0xff]
    %v141 = vld [vmem:[#allocation2 + $0x99] sm:$0xff]
    %v142 = vld [vmem:[#allocation2 + $0xa1] sm:$0xff]
    %v143 = vld [vmem:[#allocation2 + $0x2] sm:$0xff]
    %v144 = vld [vmem:[#allocation2 + $0xa] sm:$0xff]
    %v145 = vld [vmem:[#allocation2 + $0x12] sm:$0xff]
    %v146 = vld [vmem:[#allocation2 + $0x1a] sm:$0xff]
    %v147 = vld [vmem:[#allocation2 + $0x22] sm:$0xff]
    %v148 = vld [vmem:[#allocation2 + $0x2a] sm:$0xff]
    %v149 = vld [vmem:[#allocation2 + $0x32] sm:$0xff]
    %v150 = vld [vmem:[#allocation2 + $0x3a] sm:$0xff]
    %v151 = vld [vmem:[#allocation2 + $0x42] sm:$0xff]
    %v152 = vld [vmem:[#allocation2 + $0x4a] sm:$0xff]
    %v153 = vld [vmem:[#allocation2 + $0x5a] sm:$0xff]
    %v154 = vld [vmem:[#allocation2 + $0x62] sm:$0xff]
    %v155 = vld [vmem:[#allocation2 + $0x6a] sm:$0xff]
    %v156 = vld [vmem:[#allocation2 + $0x72] sm:$0xff]
    %v157 = vld [vmem:[#allocation2 + $0x7a] sm:$0xff]
    %v158 = vld [vmem:[#allocation2 + $0x82] sm:$0xff]
    %v159 = vld [vmem:[#allocation2 + $0x8a] sm:$0xff]
    %v160 = vld [vmem:[#allocation2 + $0x92] sm:$0xff]
    %v161 = vld [vmem:[#allocation2 + $0x9a] sm:$0xff]
    %v162 = vld [vmem:[#allocation2 + $0xa2] sm:$0xff]
    %v163 = vld [vmem:[%s1] sm:$0x7]
    %165 = vset.pattern.permute.xlu0 0
    %166 = vperm.xlu0 %165, %v103
    %v167 = vpop.permute.xlu0 %166
    %170 = vset.pattern.permute.xlu0 0
    %171 = vperm.xlu0 %170, %v104
    %v172 = vpop.permute.xlu0 %171
    %175 = vset.pattern.permute.xlu0 0
    %176 = vperm.xlu0 %175, %v105
    %v177 = vpop.permute.xlu0 %176
    %180 = vset.pattern.permute.xlu0 0
    %181 = vperm.xlu0 %180, %v106
    %v182 = vpop.permute.xlu0 %181
    %185 = vset.pattern.permute.xlu0 0
    %186 = vperm.xlu0 %185, %v107
    %v187 = vpop.permute.xlu0 %186
    %190 = vset.pattern.permute.xlu0 0
    %191 = vperm.xlu0 %190, %v108
    %v192 = vpop.permute.xlu0 %191
    %195 = vset.pattern.permute.xlu0 0
    %196 = vperm.xlu0 %195, %v109
    %v197 = vpop.permute.xlu0 %196
    %200 = vset.pattern.permute.xlu0 0
    %201 = vperm.xlu0 %200, %v110
    %v202 = vpop.permute.xlu0 %201
    %205 = vset.pattern.permute.xlu0 0
    %206 = vperm.xlu0 %205, %v111
    %v207 = vpop.permute.xlu0 %206
    %210 = vset.pattern.permute.xlu0 0
    %211 = vperm.xlu0 %210, %v112
    %v212 = vpop.permute.xlu0 %211
    %215 = vset.pattern.permute.xlu0 0
    %216 = vperm.xlu0 %215, %v113
    %v217 = vpop.permute.xlu0 %216
    %220 = vset.pattern.permute.xlu0 0
    %221 = vperm.xlu0 %220, %v114
    %v222 = vpop.permute.xlu0 %221
    %225 = vset.pattern.permute.xlu0 0
    %226 = vperm.xlu0 %225, %v115
    %v227 = vpop.permute.xlu0 %226
    %230 = vset.pattern.permute.xlu0 0
    %231 = vperm.xlu0 %230, %v116
    %v232 = vpop.permute.xlu0 %231
    %235 = vset.pattern.permute.xlu0 0
    %236 = vperm.xlu0 %235, %v117
    %v237 = vpop.permute.xlu0 %236
    %240 = vset.pattern.permute.xlu0 0
    %241 = vperm.xlu0 %240, %v118
    %v242 = vpop.permute.xlu0 %241
    %245 = vset.pattern.permute.xlu0 0
    %246 = vperm.xlu0 %245, %v119
    %v247 = vpop.permute.xlu0 %246
    %250 = vset.pattern.permute.xlu0 0
    %251 = vperm.xlu0 %250, %v120
    %v252 = vpop.permute.xlu0 %251
    %255 = vset.pattern.permute.xlu0 0
    %256 = vperm.xlu0 %255, %v121
    %v257 = vpop.permute.xlu0 %256
    %260 = vset.pattern.permute.xlu0 0
    %261 = vperm.xlu0 %260, %v122
    %v262 = vpop.permute.xlu0 %261
    %v264 = vlaneseq
    %v265 = vshrl.u32 %v264, 7
    %v266 = vsub.s32 0, %v265
    %v267 = vrot.slane %v163, %v266
    %v268 = vmul.f32 %v167, %v267
    %v269 = vmul.f32 %v172, %v267
    %v270 = vmul.f32 %v177, %v267
    %v271 = vmul.f32 %v182, %v267
    %v272 = vmul.f32 %v187, %v267
    %v273 = vmul.f32 %v192, %v267
    %v274 = vmul.f32 %v197, %v267
    %v275 = vmul.f32 %v202, %v267
    %v276 = vmul.f32 %v207, %v267
    %v277 = vmul.f32 %v212, %v267
    %v278 = vmul.f32 %v217, %v267
    %v279 = vmul.f32 %v222, %v267
    %v280 = vmul.f32 %v227, %v267
    %v281 = vmul.f32 %v232, %v267
    %v282 = vmul.f32 %v237, %v267
    %v283 = vmul.f32 %v242, %v267
    %v284 = vmul.f32 %v247, %v267
    %v285 = vmul.f32 %v252, %v267
    %v286 = vmul.f32 %v257, %v267
    %v287 = vmul.f32 %v262, %v267
    %289 = vset.pattern.permute.xlu0 0
    %290 = vperm.xlu0 %289, %v123
    %v291 = vpop.permute.xlu0 %290
    %294 = vset.pattern.permute.xlu0 0
    %295 = vperm.xlu0 %294, %v124
    %v296 = vpop.permute.xlu0 %295
    %299 = vset.pattern.permute.xlu0 0
    %300 = vperm.xlu0 %299, %v125
    %v301 = vpop.permute.xlu0 %300
    %304 = vset.pattern.permute.xlu0 0
    %305 = vperm.xlu0 %304, %v126
    %v306 = vpop.permute.xlu0 %305
    %309 = vset.pattern.permute.xlu0 0
    %310 = vperm.xlu0 %309, %v127
    %v311 = vpop.permute.xlu0 %310
    %314 = vset.pattern.permute.xlu0 0
    %315 = vperm.xlu0 %314, %v128
    %v316 = vpop.permute.xlu0 %315
    %319 = vset.pattern.permute.xlu0 0
    %320 = vperm.xlu0 %319, %v129
    %v321 = vpop.permute.xlu0 %320
    %324 = vset.pattern.permute.xlu0 0
    %325 = vperm.xlu0 %324, %v130
    %v326 = vpop.permute.xlu0 %325
    %329 = vset.pattern.permute.xlu0 0
    %330 = vperm.xlu0 %329, %v131
    %v331 = vpop.permute.xlu0 %330
    %334 = vset.pattern.permute.xlu0 0
    %335 = vperm.xlu0 %334, %v132
    %v336 = vpop.permute.xlu0 %335
    %339 = vset.pattern.permute.xlu0 0
    %340 = vperm.xlu0 %339, %v133
    %v341 = vpop.permute.xlu0 %340
    %344 = vset.pattern.permute.xlu0 0
    %345 = vperm.xlu0 %344, %v134
    %v346 = vpop.permute.xlu0 %345
    %349 = vset.pattern.permute.xlu0 0
    %350 = vperm.xlu0 %349, %v135
    %v351 = vpop.permute.xlu0 %350
    %354 = vset.pattern.permute.xlu0 0
    %355 = vperm.xlu0 %354, %v136
    %v356 = vpop.permute.xlu0 %355
    %359 = vset.pattern.permute.xlu0 0
    %360 = vperm.xlu0 %359, %v137
    %v361 = vpop.permute.xlu0 %360
    %364 = vset.pattern.permute.xlu0 0
    %365 = vperm.xlu0 %364, %v138
    %v366 = vpop.permute.xlu0 %365
    %369 = vset.pattern.permute.xlu0 0
    %370 = vperm.xlu0 %369, %v139
    %v371 = vpop.permute.xlu0 %370
    %374 = vset.pattern.permute.xlu0 0
    %375 = vperm.xlu0 %374, %v140
    %v376 = vpop.permute.xlu0 %375
    %379 = vset.pattern.permute.xlu0 0
    %380 = vperm.xlu0 %379, %v141
    %v381 = vpop.permute.xlu0 %380
    %384 = vset.pattern.permute.xlu0 0
    %385 = vperm.xlu0 %384, %v142
    %v386 = vpop.permute.xlu0 %385
    %v388 = vlaneseq
    %v389 = vshrl.u32 %v388, 7
    %v390 = vsub.s32 1, %v389
    %v391 = vrot.slane %v163, %v390
    %v392 = vmul.f32 %v291, %v391
    %v393 = vmul.f32 %v296, %v391
    %v394 = vmul.f32 %v301, %v391
    %v395 = vmul.f32 %v306, %v391
    %v396 = vmul.f32 %v311, %v391
    %v397 = vmul.f32 %v316, %v391
    %v398 = vmul.f32 %v321, %v391
    %v399 = vmul.f32 %v326, %v391
    %v400 = vmul.f32 %v331, %v391
    %v401 = vmul.f32 %v336, %v391
    %v402 = vmul.f32 %v341, %v391
    %v403 = vmul.f32 %v346, %v391
    %v404 = vmul.f32 %v351, %v391
    %v405 = vmul.f32 %v356, %v391
    %v406 = vmul.f32 %v361, %v391
    %v407 = vmul.f32 %v366, %v391
    %v408 = vmul.f32 %v371, %v391
    %v409 = vmul.f32 %v376, %v391
    %v410 = vmul.f32 %v381, %v391
    %v411 = vmul.f32 %v386, %v391
    %v412 = vadd.f32 %v268, %v392
    %v413 = vadd.f32 %v269, %v393
    %v414 = vadd.f32 %v270, %v394
    %v415 = vadd.f32 %v271, %v395
    %v416 = vadd.f32 %v272, %v396
    %v417 = vadd.f32 %v273, %v397
    %v418 = vadd.f32 %v274, %v398
    %v419 = vadd.f32 %v275, %v399
    %v420 = vadd.f32 %v276, %v400
    %v421 = vadd.f32 %v277, %v401
    %v422 = vadd.f32 %v278, %v402
    %v423 = vadd.f32 %v279, %v403
    %v424 = vadd.f32 %v280, %v404
    %v425 = vadd.f32 %v281, %v405
    %v426 = vadd.f32 %v282, %v406
    %v427 = vadd.f32 %v283, %v407
    %v428 = vadd.f32 %v284, %v408
    %v429 = vadd.f32 %v285, %v409
    %v430 = vadd.f32 %v286, %v410
    %v431 = vadd.f32 %v287, %v411
    %433 = vset.pattern.permute.xlu0 0
    %434 = vperm.xlu0 %433, %v143
    %v435 = vpop.permute.xlu0 %434
    %438 = vset.pattern.permute.xlu0 0
    %439 = vperm.xlu0 %438, %v144
    %v440 = vpop.permute.xlu0 %439
    %443 = vset.pattern.permute.xlu0 0
    %444 = vperm.xlu0 %443, %v145
    %v445 = vpop.permute.xlu0 %444
    %448 = vset.pattern.permute.xlu0 0
    %449 = vperm.xlu0 %448, %v146
    %v450 = vpop.permute.xlu0 %449
    %453 = vset.pattern.permute.xlu0 0
    %454 = vperm.xlu0 %453, %v147
    %v455 = vpop.permute.xlu0 %454
    %458 = vset.pattern.permute.xlu0 0
    %459 = vperm.xlu0 %458, %v148
    %v460 = vpop.permute.xlu0 %459
    %463 = vset.pattern.permute.xlu0 0
    %464 = vperm.xlu0 %463, %v149
    %v465 = vpop.permute.xlu0 %464
    %468 = vset.pattern.permute.xlu0 0
    %469 = vperm.xlu0 %468, %v150
    %v470 = vpop.permute.xlu0 %469
    %473 = vset.pattern.permute.xlu0 0
    %474 = vperm.xlu0 %473, %v151
    %v475 = vpop.permute.xlu0 %474
    %478 = vset.pattern.permute.xlu0 0
    %479 = vperm.xlu0 %478, %v152
    %v480 = vpop.permute.xlu0 %479
    %483 = vset.pattern.permute.xlu0 0
    %484 = vperm.xlu0 %483, %v153
    %v485 = vpop.permute.xlu0 %484
    %488 = vset.pattern.permute.xlu0 0
    %489 = vperm.xlu0 %488, %v154
    %v490 = vpop.permute.xlu0 %489
    %493 = vset.pattern.permute.xlu0 0
    %494 = vperm.xlu0 %493, %v155
    %v495 = vpop.permute.xlu0 %494
    %498 = vset.pattern.permute.xlu0 0
    %499 = vperm.xlu0 %498, %v156
    %v500 = vpop.permute.xlu0 %499
    %503 = vset.pattern.permute.xlu0 0
    %504 = vperm.xlu0 %503, %v157
    %v505 = vpop.permute.xlu0 %504
    %508 = vset.pattern.permute.xlu0 0
    %509 = vperm.xlu0 %508, %v158
    %v510 = vpop.permute.xlu0 %509
    %513 = vset.pattern.permute.xlu0 0
    %514 = vperm.xlu0 %513, %v159
    %v515 = vpop.permute.xlu0 %514
    %518 = vset.pattern.permute.xlu0 0
    %519 = vperm.xlu0 %518, %v160
    %v520 = vpop.permute.xlu0 %519
    %523 = vset.pattern.permute.xlu0 0
    %524 = vperm.xlu0 %523, %v161
    %v525 = vpop.permute.xlu0 %524
    %528 = vset.pattern.permute.xlu0 0
    %529 = vperm.xlu0 %528, %v162
    %v530 = vpop.permute.xlu0 %529
    %v532 = vlaneseq
    %v533 = vshrl.u32 %v532, 7
    %v534 = vsub.s32 2, %v533
    %v535 = vrot.slane %v163, %v534
    %v536 = vmul.f32 %v435, %v535
    %v537 = vmul.f32 %v440, %v535
    %v538 = vmul.f32 %v445, %v535
    %v539 = vmul.f32 %v450, %v535
    %v540 = vmul.f32 %v455, %v535
    %v541 = vmul.f32 %v460, %v535
    %v542 = vmul.f32 %v465, %v535
    %v543 = vmul.f32 %v470, %v535
    %v544 = vmul.f32 %v475, %v535
    %v545 = vmul.f32 %v480, %v535
    %v546 = vmul.f32 %v485, %v535
    %v547 = vmul.f32 %v490, %v535
    %v548 = vmul.f32 %v495, %v535
    %v549 = vmul.f32 %v500, %v535
    %v550 = vmul.f32 %v505, %v535
    %v551 = vmul.f32 %v510, %v535
    %v552 = vmul.f32 %v515, %v535
    %v553 = vmul.f32 %v520, %v535
    %v554 = vmul.f32 %v525, %v535
    %v555 = vmul.f32 %v530, %v535
    %v556 = vadd.f32 %v412, %v536
    %v557 = vadd.f32 %v413, %v537
    %v558 = vadd.f32 %v414, %v538
    %v559 = vadd.f32 %v415, %v539
    %v560 = vadd.f32 %v416, %v540
    %v561 = vadd.f32 %v417, %v541
    %v562 = vadd.f32 %v418, %v542
    %v563 = vadd.f32 %v419, %v543
    %v564 = vadd.f32 %v420, %v544
    %v565 = vadd.f32 %v421, %v545
    %v566 = vadd.f32 %v422, %v546
    %v567 = vadd.f32 %v423, %v547
    %v568 = vadd.f32 %v424, %v548
    %v569 = vadd.f32 %v425, %v549
    %v570 = vadd.f32 %v426, %v550
    %v571 = vadd.f32 %v427, %v551
    %v572 = vadd.f32 %v428, %v552
    %v573 = vadd.f32 %v429, %v553
    %v574 = vadd.f32 %v430, %v554
    %v575 = vadd.f32 %v431, %v555
    %v576 = vld [vmem:[%s2] sm:$0x1]
    %v578 = vlaneseq
    %v579 = vshrl.u32 %v578, 7
    %v580 = vsub.s32 0, %v579
    %v581 = vrot.slane %v576, %v580
    %v583 = vadd.f32 %v556, %v581
    %v584 = vadd.f32 %v557, %v581
    %v585 = vadd.f32 %v558, %v581
    %v586 = vadd.f32 %v559, %v581
    %v587 = vadd.f32 %v560, %v581
    %v588 = vadd.f32 %v561, %v581
    %v589 = vadd.f32 %v562, %v581
    %v590 = vadd.f32 %v563, %v581
    %v591 = vadd.f32 %v564, %v581
    %v592 = vadd.f32 %v565, %v581
    %v593 = vadd.f32 %v566, %v581
    %v594 = vadd.f32 %v567, %v581
    %v595 = vadd.f32 %v568, %v581
    %v596 = vadd.f32 %v569, %v581
    %v597 = vadd.f32 %v570, %v581
    %v598 = vadd.f32 %v571, %v581
    %v599 = vadd.f32 %v572, %v581
    %v600 = vadd.f32 %v573, %v581
    %v601 = vadd.f32 %v574, %v581
    %v602 = vadd.f32 %v575, %v581
    %v603 = vmax.f32 %v583, 0.0
    %v604 = vmax.f32 %v584, 0.0
    %v605 = vmax.f32 %v585, 0.0
    %v606 = vmax.f32 %v586, 0.0
    %v607 = vmax.f32 %v587, 0.0
    %v608 = vmax.f32 %v588, 0.0
    %v609 = vmax.f32 %v589, 0.0
    %v610 = vmax.f32 %v590, 0.0
    %v611 = vmax.f32 %v591, 0.0
    %v612 = vmax.f32 %v592, 0.0
    %v613 = vmax.f32 %v593, 0.0
    %v614 = vmax.f32 %v594, 0.0
    %v615 = vmax.f32 %v595, 0.0
    %v616 = vmax.f32 %v596, 0.0
    %v617 = vmax.f32 %v597, 0.0
    %v618 = vmax.f32 %v598, 0.0
    %v619 = vmax.f32 %v599, 0.0
    %v620 = vmax.f32 %v600, 0.0
    %v621 = vmax.f32 %v601, 0.0
    %v622 = vmax.f32 %v602, 0.0
    %vm623 = vcmask 261120
    %624 = vst.msk [vmem:[#allocation3] sm:$0xff] %vm623, %v603
    %625 = vst.msk [vmem:[#allocation3 + $0x8] sm:$0xff] %vm623, %v604
    %626 = vst.msk [vmem:[#allocation3 + $0x10] sm:$0xff] %vm623, %v605
    %627 = vst.msk [vmem:[#allocation3 + $0x18] sm:$0xff] %vm623, %v606
    %628 = vst.msk [vmem:[#allocation3 + $0x20] sm:$0xff] %vm623, %v607
    %629 = vst.msk [vmem:[#allocation3 + $0x28] sm:$0xff] %vm623, %v608
    %630 = vst.msk [vmem:[#allocation3 + $0x30] sm:$0xff] %vm623, %v609
    %631 = vst.msk [vmem:[#allocation3 + $0x38] sm:$0xff] %vm623, %v610
    %632 = vst.msk [vmem:[#allocation3 + $0x40] sm:$0xff] %vm623, %v611
    %633 = vst.msk [vmem:[#allocation3 + $0x48] sm:$0xff] %vm623, %v612
    %634 = vst.msk [vmem:[#allocation3 + $0x50] sm:$0xff] %vm623, %v613
    %635 = vst.msk [vmem:[#allocation3 + $0x58] sm:$0xff] %vm623, %v614
    %636 = vst.msk [vmem:[#allocation3 + $0x60] sm:$0xff] %vm623, %v615
    %637 = vst.msk [vmem:[#allocation3 + $0x68] sm:$0xff] %vm623, %v616
    %638 = vst.msk [vmem:[#allocation3 + $0x70] sm:$0xff] %vm623, %v617
    %639 = vst.msk [vmem:[#allocation3 + $0x78] sm:$0xff] %vm623, %v618
    %640 = vst.msk [vmem:[#allocation3 + $0x80] sm:$0xff] %vm623, %v619
    %641 = vst.msk [vmem:[#allocation3 + $0x88] sm:$0xff] %vm623, %v620
    %642 = vst.msk [vmem:[#allocation3 + $0x90] sm:$0xff] %vm623, %v621
    %643 = vst.msk [vmem:[#allocation3 + $0x98] sm:$0xff] %vm623, %v622
    %v644 = vld [vmem:[#allocation3] ss:$2 sm:$0xff]
    %s645 = scalar_lea.vmem [#allocation3], 16
    %v646 = vld [vmem:[%s645] ss:$2 sm:$0xff]
    %s647 = scalar_lea.vmem [#allocation3], 32
    %v648 = vld [vmem:[%s647] ss:$2 sm:$0xff]
    %s649 = scalar_lea.vmem [#allocation3], 48
    %v650 = vld [vmem:[%s649] ss:$2 sm:$0xff]
    %s651 = scalar_lea.vmem [#allocation3], 64
    %v652 = vld [vmem:[%s651] ss:$2 sm:$0xff]
    %s653 = scalar_lea.vmem [#allocation3], 80
    %v654 = vld [vmem:[%s653] ss:$2 sm:$0xff]
    %s655 = scalar_lea.vmem [#allocation3], 96
    %v656 = vld [vmem:[%s655] ss:$2 sm:$0xff]
    %s657 = scalar_lea.vmem [#allocation3], 112
    %v658 = vld [vmem:[%s657] ss:$2 sm:$0xff]
    %s659 = scalar_lea.vmem [#allocation3], 128
    %v660 = vld [vmem:[%s659] ss:$2 sm:$0xff]
    %s661 = scalar_lea.vmem [#allocation3], 144
    %v662 = vld [vmem:[%s661] ss:$2 sm:$0xff]
    %s663 = scalar_lea.vmem [#allocation3], 1
    %v664 = vld [vmem:[%s663] ss:$2 sm:$0xff]
    %s665 = scalar_lea.vmem [#allocation3], 17
    %v666 = vld [vmem:[%s665] ss:$2 sm:$0xff]
    %s667 = scalar_lea.vmem [#allocation3], 33
    %v668 = vld [vmem:[%s667] ss:$2 sm:$0xff]
    %s669 = scalar_lea.vmem [#allocation3], 49
    %v670 = vld [vmem:[%s669] ss:$2 sm:$0xff]
    %s671 = scalar_lea.vmem [#allocation3], 65
    %v672 = vld [vmem:[%s671] ss:$2 sm:$0xff]
    %s673 = scalar_lea.vmem [#allocation3], 81
    %v674 = vld [vmem:[%s673] ss:$2 sm:$0xff]
    %s675 = scalar_lea.vmem [#allocation3], 97
    %v676 = vld [vmem:[%s675] ss:$2 sm:$0xff]
    %s677 = scalar_lea.vmem [#allocation3], 113
    %v678 = vld [vmem:[%s677] ss:$2 sm:$0xff]
    %s679 = scalar_lea.vmem [#allocation3], 129
    %v680 = vld [vmem:[%s679] ss:$2 sm:$0xff]
    %s681 = scalar_lea.vmem [#allocation3], 145
    %v682 = vld [vmem:[%s681] ss:$2 sm:$0xff]
    %v683 = vmax.f32 %v644, %v664
    %v684 = vmax.f32 %v646, %v666
    %v685 = vmax.f32 %v648, %v668
    %v686 = vmax.f32 %v650, %v670
    %v687 = vmax.f32 %v652, %v672
    %v688 = vmax.f32 %v654, %v674
    %v689 = vmax.f32 %v656, %v676
    %v690 = vmax.f32 %v658, %v678
    %v691 = vmax.f32 %v660, %v680
    %v692 = vmax.f32 %v662, %v682
    %vm693 = vcmask 785408
    %694 = vst.msk [vmem:[#allocation4] sm:$0xff] %vm693, 0.0
    %695 = vst.msk [vmem:[#allocation4 + $0x8] sm:$0xff] %vm693, 0.0
    %696 = vst.msk [vmem:[#allocation4 + $0x10] sm:$0xff] %vm693, 0.0
    %697 = vst.msk [vmem:[#allocation4 + $0x18] sm:$0xff] %vm693, 0.0
    %698 = vst.msk [vmem:[#allocation4 + $0x20] sm:$0xff] %vm693, 0.0
    %vm699 = vcmask 779264
    %700 = vst.msk [vmem:[#allocation4 + $0x28] sm:$0x3] %vm699, 0.0
    %701 = vst.msk [vmem:[#allocation4 + $0x30] sm:$0xff] %vm693, 0.0
    %702 = vst.msk [vmem:[#allocation4 + $0x38] sm:$0xff] %vm693, 0.0
    %703 = vst.msk [vmem:[#allocation4 + $0x40] sm:$0xff] %vm693, 0.0
    %704 = vst.msk [vmem:[#allocation4 + $0x48] sm:$0xff] %vm693, 0.0
    %705 = vst.msk [vmem:[#allocation4 + $0x50] sm:$0xff] %vm693, 0.0
    %706 = vst.msk [vmem:[#allocation4 + $0x58] sm:$0x3] %vm699, 0.0
    %707 = vst.msk [vmem:[#allocation4 + $0x2] sm:$0xff] %vm623, %v683
    %708 = vst.msk [vmem:[#allocation4 + $0xa] sm:$0xff] %vm623, %v684
    %709 = vst.msk [vmem:[#allocation4 + $0x12] sm:$0xff] %vm623, %v685
    %710 = vst.msk [vmem:[#allocation4 + $0x1a] sm:$0xff] %vm623, %v686
    %711 = vst.msk [vmem:[#allocation4 + $0x22] sm:$0xff] %vm623, %v687
    %712 = vst.msk [vmem:[#allocation4 + $0x32] sm:$0xff] %vm623, %v688
    %713 = vst.msk [vmem:[#allocation4 + $0x3a] sm:$0xff] %vm623, %v689
    %714 = vst.msk [vmem:[#allocation4 + $0x42] sm:$0xff] %vm623, %v690
    %715 = vst.msk [vmem:[#allocation4 + $0x4a] sm:$0xff] %vm623, %v691
    %716 = vst.msk [vmem:[#allocation4 + $0x52] sm:$0xff] %vm623, %v692
    %727 = vrot.lane.b32.xlu0 %v683, 32
    %v728 = vpop.permute.xlu0 %727
    %729 = vrot.lane.b32.xlu0 %v684, 32
    %v730 = vpop.permute.xlu0 %729
    %731 = vrot.lane.b32.xlu0 %v685, 32
    %v732 = vpop.permute.xlu0 %731
    %733 = vrot.lane.b32.xlu0 %v686, 32
    %v734 = vpop.permute.xlu0 %733
    %735 = vrot.lane.b32.xlu0 %v687, 32
    %v736 = vpop.permute.xlu0 %735
    %737 = vrot.lane.b32.xlu0 %v688, 32
    %v738 = vpop.permute.xlu0 %737
    %739 = vrot.lane.b32.xlu0 %v689, 32
    %v740 = vpop.permute.xlu0 %739
    %741 = vrot.lane.b32.xlu0 %v690, 32
    %v742 = vpop.permute.xlu0 %741
    %743 = vrot.lane.b32.xlu0 %v691, 32
    %v744 = vpop.permute.xlu0 %743
    %745 = vrot.lane.b32.xlu0 %v692, 32
    %v746 = vpop.permute.xlu0 %745
    %vm757 = vcmask 523520
    %758 = vst.msk [vmem:[#allocation4 + $0x1] sm:$0xff] %vm757, %v728
    %759 = vst.msk [vmem:[#allocation4 + $0x9] sm:$0xff] %vm757, %v730
    %760 = vst.msk [vmem:[#allocation4 + $0x11] sm:$0xff] %vm757, %v732
    %761 = vst.msk [vmem:[#allocation4 + $0x19] sm:$0xff] %vm757, %v734
    %762 = vst.msk [vmem:[#allocation4 + $0x21] sm:$0xff] %vm757, %v736
    %763 = vst.msk [vmem:[#allocation4 + $0x31] sm:$0xff] %vm757, %v738
    %764 = vst.msk [vmem:[#allocation4 + $0x39] sm:$0xff] %vm757, %v740
    %765 = vst.msk [vmem:[#allocation4 + $0x41] sm:$0xff] %vm757, %v742
    %766 = vst.msk [vmem:[#allocation4 + $0x49] sm:$0xff] %vm757, %v744
    %767 = vst.msk [vmem:[#allocation4 + $0x51] sm:$0xff] %vm757, %v746
    %768 = vrot.lane.b32.xlu0 %v683, 64
    %v769 = vpop.permute.xlu0 %768
    %770 = vrot.lane.b32.xlu0 %v684, 64
    %v771 = vpop.permute.xlu0 %770
    %772 = vrot.lane.b32.xlu0 %v685, 64
    %v773 = vpop.permute.xlu0 %772
    %774 = vrot.lane.b32.xlu0 %v686, 64
    %v775 = vpop.permute.xlu0 %774
    %776 = vrot.lane.b32.xlu0 %v687, 64
    %v777 = vpop.permute.xlu0 %776
    %778 = vrot.lane.b32.xlu0 %v688, 64
    %v779 = vpop.permute.xlu0 %778
    %780 = vrot.lane.b32.xlu0 %v689, 64
    %v781 = vpop.permute.xlu0 %780
    %782 = vrot.lane.b32.xlu0 %v690, 64
    %v783 = vpop.permute.xlu0 %782
    %784 = vrot.lane.b32.xlu0 %v691, 64
    %v785 = vpop.permute.xlu0 %784
    %786 = vrot.lane.b32.xlu0 %v692, 64
    %v787 = vpop.permute.xlu0 %786
    %vm798 = vcmask 785920
    %799 = vst.msk [vmem:[#allocation4] sm:$0xff] %vm798, %v769
    %800 = vst.msk [vmem:[#allocation4 + $0x8] sm:$0xff] %vm798, %v771
    %801 = vst.msk [vmem:[#allocation4 + $0x10] sm:$0xff] %vm798, %v773
    %802 = vst.msk [vmem:[#allocation4 + $0x18] sm:$0xff] %vm798, %v775
    %803 = vst.msk [vmem:[#allocation4 + $0x20] sm:$0xff] %vm798, %v777
    %804 = vst.msk [vmem:[#allocation4 + $0x30] sm:$0xff] %vm798, %v779
    %805 = vst.msk [vmem:[#allocation4 + $0x38] sm:$0xff] %vm798, %v781
    %806 = vst.msk [vmem:[#allocation4 + $0x40] sm:$0xff] %vm798, %v783
    %807 = vst.msk [vmem:[#allocation4 + $0x48] sm:$0xff] %vm798, %v785
    %808 = vst.msk [vmem:[#allocation4 + $0x50] sm:$0xff] %vm798, %v787
    %v809 = vld [vmem:[#allocation4 + $0x1] sm:$0xff]
    %v810 = vld [vmem:[#allocation4 + $0x9] sm:$0xff]
    %v811 = vld [vmem:[#allocation4 + $0x11] sm:$0xff]
    %v812 = vld [vmem:[#allocation4 + $0x19] sm:$0xff]
    %v813 = vld [vmem:[#allocation4 + $0x21] sm:$0xff]
    %v814 = vld [vmem:[#allocation4 + $0x31] sm:$0xff]
    %v815 = vld [vmem:[#allocation4 + $0x39] sm:$0xff]
    %v816 = vld [vmem:[#allocation4 + $0x41] sm:$0xff]
    %v817 = vld [vmem:[#allocation4 + $0x49] sm:$0xff]
    %v818 = vld [vmem:[#allocation4 + $0x51] sm:$0xff]
    %v819 = vld [vmem:[%s3] sm:$0xff]
    %v820 = vld [vmem:[%s3 + $0x8] sm:$0xff]
    %v821 = vld [vmem:[%s3 + $0x10] sm:$0xff]
    %v822 = vld [vmem:[%s3 + $0x18] sm:$0xff]
    %v823 = vld [vmem:[%s3 + $0x20] sm:$0xff]
    %v824 = vld [vmem:[%s3 + $0x28] sm:$0xff]
    %v825 = vld [vmem:[%s3 + $0x30] sm:$0xff]
    %v826 = vld [vmem:[%s3 + $0x38] sm:$0xff]
    %v827 = vld [vmem:[%s3 + $0x40] sm:$0xff]
    %v828 = vld [vmem:[%s3 + $0x48] sm:$0xff]
    %v829 = vld [vmem:[%s3 + $0x50] sm:$0xff]
    %v830 = vld [vmem:[%s3 + $0x58] sm:$0xff]
    %v831 = vld [vmem:[%s4] sm:$0x1]
    %v833 = vlaneseq
    %v834 = vshrl.u32 %v833, 7
    %v835 = vsub.s32 0, %v834
    %v836 = vrot.slane %v831, %v835
    %v839 = vsel %vm693, %v809, 0
    %v842 = vsel %vm693, %v810, 0
    %v845 = vsel %vm693, %v811, 0
    %v848 = vsel %vm693, %v812, 0
    %v851 = vsel %vm693, %v813, 0
    %v854 = vsel %vm693, %v814, 0
    %v857 = vsel %vm693, %v815, 0
    %v860 = vsel %vm693, %v816, 0
    %v863 = vsel %vm693, %v817, 0
    %v866 = vsel %vm693, %v818, 0
    %868 = vmatprep.subr.mxu0 0.0
    %869 = vmatpush1.msra.mxu0 0.0
    %870 = vmatprep.subr.mxu0 0.0
    %871 = vmatpush1.msra.mxu0 0.0
    %872 = vmatprep.subr.mxu0 0.0
    %873 = vmatpush1.msra.mxu0 0.0
    %874 = vmatprep.subr.mxu0 0.0
    %875 = vmatpush1.msra.mxu0 0.0
    %876 = vmatprep.subr.mxu0 0.0
    %877 = vmatpush1.msra.mxu0 %v830
    %878 = vmatprep.subr.mxu0 0.0
    %879 = vmatpush1.msra.mxu0 %v829
    %880 = vmatprep.subr.mxu0 0.0
    %881 = vmatpush1.msra.mxu0 %v828
    %882 = vmatprep.subr.mxu0 0.0
    %883 = vmatpush1.msra.mxu0 %v827
    %884 = vmatprep.subr.mxu0 0.0
    %885 = vmatpush1.msra.mxu0 %v826
    %886 = vmatprep.subr.mxu0 0.0
    %887 = vmatpush1.msra.mxu0 %v825
    %888 = vmatprep.subr.mxu0 0.0
    %889 = vmatpush1.msra.mxu0 %v824
    %890 = vmatprep.subr.mxu0 0.0
    %891 = vmatpush1.msra.mxu0 %v823
    %892 = vmatprep.subr.mxu0 0.0
    %893 = vmatpush1.msra.mxu0 %v822
    %894 = vmatprep.subr.mxu0 0.0
    %895 = vmatpush1.msra.mxu0 %v821
    %896 = vmatprep.subr.mxu0 0.0
    %897 = vmatpush1.msra.mxu0 %v820
    %898 = vmatprep.subr.mxu0 0.0
    %899 = vmatpush1.msra.mxu0 %v819
    %900 = vmatprep.subr.mxu0 0.0
    %901 = vmatpush2.msra.mxu0 0.0
    %902 = vmatprep.subr.mxu0 0.0
    %903 = vmatpush2.msra.mxu0 0.0
    %904 = vmatprep.subr.mxu0 0.0
    %905 = vmatpush2.msra.mxu0 0.0
    %906 = vmatprep.subr.mxu0 0.0
    %907 = vmatpush2.msra.mxu0 0.0
    %908 = vmatprep.subr.mxu0 0.0
    %909 = vmatpush2.msra.mxu0 0.0
    %910 = vmatprep.subr.mxu0 0.0
    %911 = vmatpush2.msra.mxu0 0.0
    %912 = vmatprep.subr.mxu0 0.0
    %913 = vmatpush2.msra.mxu0 0.0
    %914 = vmatprep.subr.mxu0 0.0
    %915 = vmatpush2.msra.mxu0 0.0
    %916 = vmatprep.subr.mxu0 0.0
    %917 = vmatpush2.msra.mxu0 0.0
    %918 = vmatprep.subr.mxu0 0.0
    %919 = vmatpush2.msra.mxu0 0.0
    %920 = vmatprep.subr.mxu0 0.0
    %921 = vmatpush2.msra.mxu0 0.0
    %922 = vmatprep.subr.mxu0 0.0
    %923 = vmatpush2.msra.mxu0 0.0
    %924 = vmatprep.subr.mxu0 0.0
    %925 = vmatpush2.msra.mxu0 0.0
    %926 = vmatprep.subr.mxu0 0.0
    %927 = vmatpush2.msra.mxu0 0.0
    %928 = vmatprep.subr.mxu0 0.0
    %929 = vmatpush2.msra.mxu0 0.0
    %930 = vmatprep.subr.mxu0 0.0
    %931 = vmatpush2.msra.mxu0 0.0
    %932 = vmatprep.mubr.f32.mxu0 0.0
    %933 = vmatmul.mubr.f32.gmra.mxu0 %v839
    %v934 = vpop.f32.mrf.mxu0
    %v935 = vadd.f32 %v836, %v934
    %v936 = vpop.f32.mrf.mxu0
    %937 = vmatprep.mubr.f32.mxu0 0.0
    %938 = vmatmul.mubr.f32.gmra.mxu0 %v842
    %v939 = vpop.f32.mrf.mxu0
    %v940 = vadd.f32 %v836, %v939
    %v941 = vpop.f32.mrf.mxu0
    %942 = vmatprep.mubr.f32.mxu0 0.0
    %943 = vmatmul.mubr.f32.gmra.mxu0 %v845
    %v944 = vpop.f32.mrf.mxu0
    %v945 = vadd.f32 %v836, %v944
    %v946 = vpop.f32.mrf.mxu0
    %947 = vmatprep.mubr.f32.mxu0 0.0
    %948 = vmatmul.mubr.f32.gmra.mxu0 %v848
    %v949 = vpop.f32.mrf.mxu0
    %v950 = vadd.f32 %v836, %v949
    %v951 = vpop.f32.mrf.mxu0
    %952 = vmatprep.mubr.f32.mxu0 0.0
    %953 = vmatmul.mubr.f32.gmra.mxu0 %v851
    %v954 = vpop.f32.mrf.mxu0
    %v955 = vadd.f32 %v836, %v954
    %v956 = vpop.f32.mrf.mxu0
    %957 = vmatprep.mubr.f32.mxu0 0.0
    %958 = vmatmul.mubr.f32.gmra.mxu0 %v854
    %v959 = vpop.f32.mrf.mxu0
    %v960 = vadd.f32 %v836, %v959
    %v961 = vpop.f32.mrf.mxu0
    %962 = vmatprep.mubr.f32.mxu0 0.0
    %963 = vmatmul.mubr.f32.gmra.mxu0 %v857
    %v964 = vpop.f32.mrf.mxu0
    %v965 = vadd.f32 %v836, %v964
    %v966 = vpop.f32.mrf.mxu0
    %967 = vmatprep.mubr.f32.mxu0 0.0
    %968 = vmatmul.mubr.f32.gmra.mxu0 %v860
    %v969 = vpop.f32.mrf.mxu0
    %v970 = vadd.f32 %v836, %v969
    %v971 = vpop.f32.mrf.mxu0
    %972 = vmatprep.mubr.f32.mxu0 0.0
    %973 = vmatmul.mubr.f32.gmra.mxu0 %v863
    %v974 = vpop.f32.mrf.mxu0
    %v975 = vadd.f32 %v836, %v974
    %v976 = vpop.f32.mrf.mxu0
    %977 = vmatprep.mubr.f32.mxu0 0.0
    %978 = vmatmul.mubr.f32.gmra.mxu0 %v866
    %v979 = vpop.f32.mrf.mxu0
    %v980 = vadd.f32 %v836, %v979
    %v981 = vpop.f32.mrf.mxu0
    %982 = vdwg.mxu0
    %v983 = vmax.f32 %v935, 0.0
    %v984 = vmax.f32 %v940, 0.0
    %v985 = vmax.f32 %v945, 0.0
    %v986 = vmax.f32 %v950, 0.0
    %v987 = vmax.f32 %v955, 0.0
    %v988 = vmax.f32 %v960, 0.0
    %v989 = vmax.f32 %v965, 0.0
    %v990 = vmax.f32 %v970, 0.0
    %v991 = vmax.f32 %v975, 0.0
    %v992 = vmax.f32 %v980, 0.0
    %vm993 = vcmask 523264
    %994 = vst.msk [vmem:[#allocation5] sm:$0xff] %vm993, %v983
    %995 = vst.msk [vmem:[#allocation5 + $0x8] sm:$0xff] %vm993, %v984
    %996 = vst.msk [vmem:[#allocation5 + $0x10] sm:$0xff] %vm993, %v985
    %997 = vst.msk [vmem:[#allocation5 + $0x18] sm:$0xff] %vm993, %v986
    %998 = vst.msk [vmem:[#allocation5 + $0x20] sm:$0xff] %vm993, %v987
    %999 = vst.msk [vmem:[#allocation5 + $0x28] sm:$0xff] %vm993, %v988
    %1000 = vst.msk [vmem:[#allocation5 + $0x30] sm:$0xff] %vm993, %v989
    %1001 = vst.msk [vmem:[#allocation5 + $0x38] sm:$0xff] %vm993, %v990
    %1002 = vst.msk [vmem:[#allocation5 + $0x40] sm:$0xff] %vm993, %v991
    %1003 = vst.msk [vmem:[#allocation5 + $0x48] sm:$0xff] %vm993, %v992
    %v1004 = vld [vmem:[#allocation5] ss:$2 sm:$0xff]
    %s1005 = scalar_lea.vmem [#allocation5], 16
    %v1006 = vld [vmem:[%s1005] ss:$2 sm:$0xff]
    %s1007 = scalar_lea.vmem [#allocation5], 32
    %v1008 = vld [vmem:[%s1007] ss:$2 sm:$0xff]
    %s1009 = scalar_lea.vmem [#allocation5], 48
    %v1010 = vld [vmem:[%s1009] ss:$2 sm:$0xff]
    %s1011 = scalar_lea.vmem [#allocation5], 64
    %v1012 = vld [vmem:[%s1011] ss:$2 sm:$0xff]
    %s1013 = scalar_lea.vmem [#allocation5], 1
    %v1014 = vld [vmem:[%s1013] ss:$2 sm:$0xff]
    %s1015 = scalar_lea.vmem [#allocation5], 17
    %v1016 = vld [vmem:[%s1015] ss:$2 sm:$0xff]
    %s1017 = scalar_lea.vmem [#allocation5], 33
    %v1018 = vld [vmem:[%s1017] ss:$2 sm:$0xff]
    %s1019 = scalar_lea.vmem [#allocation5], 49
    %v1020 = vld [vmem:[%s1019] ss:$2 sm:$0xff]
    %s1021 = scalar_lea.vmem [#allocation5], 65
    %v1022 = vld [vmem:[%s1021] ss:$2 sm:$0xff]
    %v1023 = vmax.f32 %v1004, %v1014
    %v1024 = vmax.f32 %v1006, %v1016
    %v1025 = vmax.f32 %v1008, %v1018
    %v1026 = vmax.f32 %v1010, %v1020
    %v1027 = vmax.f32 %v1012, %v1022
    %v1033 = vcombine.high %v1023, %v1023
    %v1034 = vcombine.high %v1024, %v1024
    %v1035 = vcombine.high %v1025, %v1025
    %v1036 = vcombine.high %v1026, %v1026
    %v1037 = vcombine.high %v1027, %v1027
    %1039 = vst [vmem:[#allocation6] sm:$0xff] 0.0
    %1040 = vst.msk [vmem:[#allocation6 + $0x8] sm:$0xff] %vm993, 0.0
    %1041 = vst [vmem:[#allocation6 + $0x10] sm:$0xff] 0.0
    %1042 = vst.msk [vmem:[#allocation6 + $0x18] sm:$0xff] %vm993, 0.0
    %1043 = vst [vmem:[#allocation6 + $0x20] sm:$0x3f] 0.0
    %vm1044 = vcmask 521216
    %1045 = vst.msk [vmem:[#allocation6 + $0x28] sm:$0x3f] %vm1044, 0.0
    %1046 = vst [vmem:[#allocation6 + $0x30] sm:$0xff] 0.0
    %1047 = vst.msk [vmem:[#allocation6 + $0x38] sm:$0xff] %vm993, 0.0
    %1048 = vst [vmem:[#allocation6 + $0x40] sm:$0xff] 0.0
    %1049 = vst.msk [vmem:[#allocation6 + $0x48] sm:$0xff] %vm993, 0.0
    %1050 = vst [vmem:[#allocation6 + $0x50] sm:$0x3f] 0.0
    %1051 = vst.msk [vmem:[#allocation6 + $0x58] sm:$0x3f] %vm1044, 0.0
    %v1052 = vcombine.low %v1023, %v1033
    %v1053 = vcombine.low %v1024, %v1034
    %v1054 = vcombine.low %v1035, %v1026
    %v1055 = vcombine.low %v1036, %v1027
    %vm1056 = vcmask 1041408
    %v1057 = vrot.slane %v1052, 6
    %v1058 = vrot.slane %v1053, 6
    %v1059 = vsel %vm1056, %v1057, %v1058
    %v1060 = vrot.slane %v1025, 6
    %v1061 = vsel %vm1056, %v1058, %v1060
    %v1062 = vrot.slane %v1054, 6
    %v1063 = vrot.slane %v1055, 6
    %v1064 = vsel %vm1056, %v1062, %v1063
    %v1065 = vrot.slane %v1037, 6
    %v1066 = vsel %vm1056, %v1063, %v1065
    %vm1073 = vcmask 523266
    %1074 = vst.msk [vmem:[#allocation6] sm:$0xfc] %vm1073, %v1057
    %1075 = vst.msk [vmem:[#allocation6 + $0x10] sm:$0xff] %vm993, %v1059
    %1076 = vst.msk [vmem:[#allocation6 + $0x20] sm:$0x3f] %vm1044, %v1061
    %1077 = vst.msk [vmem:[#allocation6 + $0x30] sm:$0xfc] %vm1073, %v1062
    %1078 = vst.msk [vmem:[#allocation6 + $0x40] sm:$0xff] %vm993, %v1064
    %1079 = vst.msk [vmem:[#allocation6 + $0x50] sm:$0x3f] %vm1044, %v1066
    %vm1080 = vcmask 1040384
    %v1081 = vrot.slane %v1052, 7
    %v1082 = vrot.slane %v1053, 7
    %v1083 = vsel %vm1080, %v1081, %v1082
    %v1084 = vrot.slane %v1025, 7
    %v1085 = vsel %vm1080, %v1082, %v1084
    %v1086 = vrot.slane %v1054, 7
    %v1087 = vrot.slane %v1055, 7
    %v1088 = vsel %vm1080, %v1086, %v1087
    %v1089 = vrot.slane %v1037, 7
    %v1090 = vsel %vm1080, %v1087, %v1089
    %1091 = vrot.lane.b32.xlu0 %v1081, 64
    %v1092 = vpop.permute.xlu0 %1091
    %1093 = vrot.lane.b32.xlu0 %v1083, 64
    %v1094 = vpop.permute.xlu0 %1093
    %1095 = vrot.lane.b32.xlu0 %v1085, 64
    %v1096 = vpop.permute.xlu0 %1095
    %1097 = vrot.lane.b32.xlu0 %v1086, 64
    %v1098 = vpop.permute.xlu0 %1097
    %1099 = vrot.lane.b32.xlu0 %v1088, 64
    %v1100 = vpop.permute.xlu0 %1099
    %1101 = vrot.lane.b32.xlu0 %v1090, 64
    %v1102 = vpop.permute.xlu0 %1101
    %vm1109 = vcmask 1048065
    %1110 = vst.msk [vmem:[#allocation6] sm:$0xfe] %vm1109, %v1092
    %vm1111 = vcmask 1048064
    %1112 = vst.msk [vmem:[#allocation6 + $0x10] sm:$0xff] %vm1111, %v1094
    %vm1113 = vcmask 1044992
    %1114 = vst.msk [vmem:[#allocation6 + $0x20] sm:$0x1f] %vm1113, %v1096
    %1115 = vst.msk [vmem:[#allocation6 + $0x30] sm:$0xfe] %vm1109, %v1098
    %1116 = vst.msk [vmem:[#allocation6 + $0x40] sm:$0xff] %vm1111, %v1100
    %1117 = vst.msk [vmem:[#allocation6 + $0x50] sm:$0x1f] %vm1113, %v1102
    %1122 = vst.msk [vmem:[#allocation6 + $0x8] sm:$0xff] %vm993, %v1052
    %1123 = vst.msk [vmem:[#allocation6 + $0x18] sm:$0xff] %vm993, %v1053
    %vm1124 = vcmask 519168
    %1125 = vst.msk [vmem:[#allocation6 + $0x28] sm:$0xf] %vm1124, %v1025
    %1126 = vst.msk [vmem:[#allocation6 + $0x38] sm:$0xff] %vm993, %v1054
    %1127 = vst.msk [vmem:[#allocation6 + $0x48] sm:$0xff] %vm993, %v1055
    %1128 = vst.msk [vmem:[#allocation6 + $0x58] sm:$0xf] %vm1124, %v1037
    %v1129 = vld [vmem:[#allocation6] sm:$0xfe]
    %v1130 = vld [vmem:[#allocation6 + $0x8] sm:$0xfe]
    %v1131 = vld [vmem:[#allocation6 + $0x10] sm:$0xff]
    %v1132 = vld [vmem:[#allocation6 + $0x18] sm:$0xff]
    %v1133 = vld [vmem:[#allocation6 + $0x20] sm:$0x1f]
    %v1134 = vld [vmem:[#allocation6 + $0x28] sm:$0x1f]
    %v1135 = vld [vmem:[#allocation6 + $0x30] sm:$0xfe]
    %v1136 = vld [vmem:[#allocation6 + $0x38] sm:$0xfe]
    %v1137 = vld [vmem:[#allocation6 + $0x40] sm:$0xff]
    %v1138 = vld [vmem:[#allocation6 + $0x48] sm:$0xff]
    %v1139 = vld [vmem:[#allocation6 + $0x50] sm:$0x1f]
    %v1140 = vld [vmem:[#allocation6 + $0x58] sm:$0x1f]
    %v1153 = vcombine.low %v1129, %v1130
    %v1154 = vcombine.high %v1129, %v1130
    %v1155 = vcombine.low %v1131, %v1132
    %v1156 = vcombine.high %v1131, %v1132
    %v1157 = vcombine.low %v1133, %v1134
    %v1158 = vcombine.high %v1133, %v1134
    %v1159 = vcombine.low %v1135, %v1136
    %v1160 = vcombine.high %v1135, %v1136
    %v1161 = vcombine.low %v1137, %v1138
    %v1162 = vcombine.high %v1137, %v1138
    %v1163 = vcombine.low %v1139, %v1140
    %v1164 = vcombine.high %v1139, %v1140
    %vm1165 = vcmask 1042432
    %vm1166 = vcmask 1046532
    %vm1167 = vmor %vm1165, %vm1166
    %v1168 = vrot.slane %v1153, 5
    %v1169 = vrot.slane %v1168, 4
    %v1170 = vrot.slane %v1154, 5
    %v1171 = vsel %vm1167, %v1169, %v1170
    %v1172 = vrot.slane %v1170, 4
    %v1173 = vrot.slane %v1155, 5
    %v1174 = vsel %vm1167, %v1172, %v1173
    %v1175 = vrot.slane %v1173, 4
    %v1176 = vrot.slane %v1156, 5
    %v1177 = vsel %vm1167, %v1175, %v1176
    %v1178 = vrot.slane %v1176, 4
    %v1179 = vrot.slane %v1157, 5
    %v1180 = vsel %vm1167, %v1178, %v1179
    %v1181 = vrot.slane %v1179, 4
    %v1182 = vrot.slane %v1158, 5
    %v1183 = vsel %vm1167, %v1181, %v1182
    %v1184 = vrot.slane %v1159, 5
    %v1185 = vrot.slane %v1184, 4
    %v1186 = vrot.slane %v1160, 5
    %v1187 = vsel %vm1167, %v1185, %v1186
    %v1188 = vrot.slane %v1186, 4
    %v1189 = vrot.slane %v1161, 5
    %v1190 = vsel %vm1167, %v1188, %v1189
    %v1191 = vrot.slane %v1189, 4
    %v1192 = vrot.slane %v1162, 5
    %v1193 = vsel %vm1167, %v1191, %v1192
    %v1194 = vrot.slane %v1192, 4
    %v1195 = vrot.slane %v1163, 5
    %v1196 = vsel %vm1167, %v1194, %v1195
    %v1197 = vrot.slane %v1195, 4
    %v1198 = vrot.slane %v1164, 5
    %v1199 = vsel %vm1167, %v1197, %v1198
    %v1200 = vld [vmem:[%s5] sm:$0xff]
    %v1201 = vld [vmem:[%s5 + $0x8] sm:$0xff]
    %v1202 = vld [vmem:[%s5 + $0x10] sm:$0xff]
    %v1203 = vld [vmem:[%s5 + $0x18] sm:$0xff]
    %v1204 = vld [vmem:[%s5 + $0x20] sm:$0xff]
    %v1205 = vld [vmem:[%s5 + $0x28] sm:$0xff]
    %v1206 = vld [vmem:[%s5 + $0x30] sm:$0xff]
    %v1207 = vld [vmem:[%s5 + $0x38] sm:$0xff]
    %v1208 = vld [vmem:[%s5 + $0x40] sm:$0xff]
    %v1209 = vld [vmem:[%s5 + $0x48] sm:$0xff]
    %v1210 = vld [vmem:[%s5 + $0x50] sm:$0xff]
    %v1211 = vld [vmem:[%s5 + $0x58] sm:$0xff]
    %v1212 = vld [vmem:[%s5 + $0x60] sm:$0xff]
    %v1213 = vld [vmem:[%s5 + $0x68] sm:$0xff]
    %v1214 = vld [vmem:[%s5 + $0x70] sm:$0xff]
    %v1215 = vld [vmem:[%s5 + $0x78] sm:$0xff]
    %v1216 = vld [vmem:[%s5 + $0x80] sm:$0xff]
    %v1217 = vld [vmem:[%s5 + $0x88] sm:$0xff]
    %v1218 = vld [vmem:[%s5 + $0x90] sm:$0xff]
    %v1219 = vld [vmem:[%s5 + $0x98] sm:$0xff]
    %v1220 = vld [vmem:[%s5 + $0xa0] sm:$0xff]
    %v1221 = vld [vmem:[%s5 + $0xa8] sm:$0xff]
    %v1222 = vld [vmem:[%s5 + $0xb0] sm:$0xff]
    %v1223 = vld [vmem:[%s5 + $0xb8] sm:$0xff]
    %v1224 = vld [vmem:[%s6] sm:$0x1]
    %v1226 = vlaneseq
    %v1227 = vshrl.u32 %v1226, 7
    %v1228 = vsub.s32 0, %v1227
    %v1229 = vrot.slane %v1224, %v1228
    %v1231 = vcombine.low %v1171, %v1174
    %v1232 = vcombine.high %v1171, %v1174
    %v1233 = vcombine.low %v1177, %v1180
    %v1234 = vcombine.high %v1177, %v1180
    %v1235 = vcombine.low %v1183, %v1187
    %v1236 = vcombine.high %v1183, %v1187
    %v1237 = vcombine.low %v1190, %v1193
    %v1238 = vcombine.high %v1190, %v1193
    %v1239 = vcombine.low %v1196, %v1199
    %v1240 = vcombine.high %v1196, %v1199
    %v1246 = vsel %vm993, %v1232, 0
    %v1248 = vsel %vm993, %v1234, 0
    %v1250 = vsel %vm993, %v1236, 0
    %v1252 = vsel %vm993, %v1238, 0
    %v1254 = vsel %vm993, %v1240, 0
    %1256 = vmatprep.subr.mxu0 0.0
    %1257 = vmatpush1.msra.mxu0 %v1215
    %1258 = vmatprep.subr.mxu0 0.0
    %1259 = vmatpush1.msra.mxu0 %v1214
    %1260 = vmatprep.subr.mxu0 0.0
    %1261 = vmatpush1.msra.mxu0 %v1213
    %1262 = vmatprep.subr.mxu0 0.0
    %1263 = vmatpush1.msra.mxu0 %v1212
    %1264 = vmatprep.subr.mxu0 0.0
    %1265 = vmatpush1.msra.mxu0 %v1211
    %1266 = vmatprep.subr.mxu0 0.0
    %1267 = vmatpush1.msra.mxu0 %v1210
    %1268 = vmatprep.subr.mxu0 0.0
    %1269 = vmatpush1.msra.mxu0 %v1209
    %1270 = vmatprep.subr.mxu0 0.0
    %1271 = vmatpush1.msra.mxu0 %v1208
    %1272 = vmatprep.subr.mxu0 0.0
    %1273 = vmatpush1.msra.mxu0 %v1207
    %1274 = vmatprep.subr.mxu0 0.0
    %1275 = vmatpush1.msra.mxu0 %v1206
    %1276 = vmatprep.subr.mxu0 0.0
    %1277 = vmatpush1.msra.mxu0 %v1205
    %1278 = vmatprep.subr.mxu0 0.0
    %1279 = vmatpush1.msra.mxu0 %v1204
    %1280 = vmatprep.subr.mxu0 0.0
    %1281 = vmatpush1.msra.mxu0 %v1203
    %1282 = vmatprep.subr.mxu0 0.0
    %1283 = vmatpush1.msra.mxu0 %v1202
    %1284 = vmatprep.subr.mxu0 0.0
    %1285 = vmatpush1.msra.mxu0 %v1201
    %1286 = vmatprep.subr.mxu0 0.0
    %1287 = vmatpush1.msra.mxu0 %v1200
    %1288 = vmatprep.subr.mxu0 0.0
    %1289 = vmatpush2.msra.mxu0 0.0
    %1290 = vmatprep.subr.mxu0 0.0
    %1291 = vmatpush2.msra.mxu0 0.0
    %1292 = vmatprep.subr.mxu0 0.0
    %1293 = vmatpush2.msra.mxu0 0.0
    %1294 = vmatprep.subr.mxu0 0.0
    %1295 = vmatpush2.msra.mxu0 0.0
    %1296 = vmatprep.subr.mxu0 0.0
    %1297 = vmatpush2.msra.mxu0 0.0
    %1298 = vmatprep.subr.mxu0 0.0
    %1299 = vmatpush2.msra.mxu0 0.0
    %1300 = vmatprep.subr.mxu0 0.0
    %1301 = vmatpush2.msra.mxu0 0.0
    %1302 = vmatprep.subr.mxu0 0.0
    %1303 = vmatpush2.msra.mxu0 0.0
    %1304 = vmatprep.subr.mxu0 0.0
    %1305 = vmatpush2.msra.mxu0 %v1223
    %1306 = vmatprep.subr.mxu0 0.0
    %1307 = vmatpush2.msra.mxu0 %v1222
    %1308 = vmatprep.subr.mxu0 0.0
    %1309 = vmatpush2.msra.mxu0 %v1221
    %1310 = vmatprep.subr.mxu0 0.0
    %1311 = vmatpush2.msra.mxu0 %v1220
    %1312 = vmatprep.subr.mxu0 0.0
    %1313 = vmatpush2.msra.mxu0 %v1219
    %1314 = vmatprep.subr.mxu0 0.0
    %1315 = vmatpush2.msra.mxu0 %v1218
    %1316 = vmatprep.subr.mxu0 0.0
    %1317 = vmatpush2.msra.mxu0 %v1217
    %1318 = vmatprep.subr.mxu0 0.0
    %1319 = vmatpush2.msra.mxu0 %v1216
    %1320 = vmatprep.mubr.f32.mxu0 %v1246
    %1321 = vmatmul.mubr.f32.gmra.mxu0 %v1231
    %v1322 = vpop.f32.mrf.mxu0
    %v1323 = vadd.f32 %v1229, %v1322
    %v1324 = vpop.f32.mrf.mxu0
    %1325 = vmatprep.mubr.f32.mxu0 %v1248
    %1326 = vmatmul.mubr.f32.gmra.mxu0 %v1233
    %v1327 = vpop.f32.mrf.mxu0
    %v1328 = vadd.f32 %v1229, %v1327
    %v1329 = vpop.f32.mrf.mxu0
    %1330 = vmatprep.mubr.f32.mxu0 %v1250
    %1331 = vmatmul.mubr.f32.gmra.mxu0 %v1235
    %v1332 = vpop.f32.mrf.mxu0
    %v1333 = vadd.f32 %v1229, %v1332
    %v1334 = vpop.f32.mrf.mxu0
    %1335 = vmatprep.mubr.f32.mxu0 %v1252
    %1336 = vmatmul.mubr.f32.gmra.mxu0 %v1237
    %v1337 = vpop.f32.mrf.mxu0
    %v1338 = vadd.f32 %v1229, %v1337
    %v1339 = vpop.f32.mrf.mxu0
    %1340 = vmatprep.mubr.f32.mxu0 %v1254
    %1341 = vmatmul.mubr.f32.gmra.mxu0 %v1239
    %v1342 = vpop.f32.mrf.mxu0
    %v1343 = vadd.f32 %v1229, %v1342
    %v1344 = vpop.f32.mrf.mxu0
    %1345 = vdwg.mxu0
    %v1346 = vmax.f32 %v1323, 0.0
    %v1347 = vmax.f32 %v1328, 0.0
    %v1348 = vmax.f32 %v1333, 0.0
    %v1349 = vmax.f32 %v1338, 0.0
    %v1350 = vmax.f32 %v1343, 0.0
    %1351 = vst [vmem:[#allocation7] sm:$0xff] %v1346
    %1352 = vst [vmem:[#allocation7 + $0x8] sm:$0xff] %v1347
    %1353 = vst [vmem:[#allocation7 + $0x10] sm:$0xff] %v1348
    %1354 = vst [vmem:[#allocation7 + $0x18] sm:$0xff] %v1349
    %1355 = vst [vmem:[#allocation7 + $0x20] sm:$0xff] %v1350
    %v1356 = vld [vmem:[#allocation7] ss:$2 sm:$0xff]
    %s1357 = scalar_lea.vmem [#allocation7], 16
    %v1358 = vld [vmem:[%s1357] ss:$2 sm:$0xff]
    %s1359 = scalar_lea.vmem [#allocation7], 32
    %v1360 = vld [vmem:[%s1359] ss:$2 sm:$0xf]
    %s1361 = scalar_lea.vmem [#allocation7], 1
    %v1362 = vld [vmem:[%s1361] ss:$2 sm:$0xff]
    %s1363 = scalar_lea.vmem [#allocation7], 17
    %v1364 = vld [vmem:[%s1363] ss:$2 sm:$0xff]
    %s1365 = scalar_lea.vmem [#allocation7], 33
    %v1366 = vld [vmem:[%s1365] ss:$2 sm:$0xf]
    %v1367 = vmax.f32 %v1356, %v1362
    %v1368 = vmax.f32 %v1358, %v1364
    %v1369 = vmax.f32 %v1360, %v1366
    %v1373 = vcombine.high %v1367, %v1367
    %v1375 = vunpack.c.l.s4 1983009808
    %v1376 = vunpack.c.0.s8 %v1375
    %v1377 = vlaneseq
    %v1378 = vshrl.u32 %v1377, 7
    %v1379 = vsub.s32 %v1376, %v1378
    %v1380 = vrot.slane %v1367, %v1379
    %v1382 = vunpack.c.l.s4 1983009808
    %v1383 = vunpack.c.0.s8 %v1382
    %v1384 = vlaneseq
    %v1385 = vshrl.u32 %v1384, 7
    %v1386 = vsub.s32 %v1383, %v1385
    %v1387 = vrot.slane %v1373, %v1386
    %v1388 = vcombine.high %v1380, %v1380
    %v1389 = vcombine.high %v1387, %v1387
    %v1390 = vcombine.high %v1368, %v1368
    %v1392 = vunpack.c.l.s4 1983009808
    %v1393 = vunpack.c.0.s8 %v1392
    %v1394 = vlaneseq
    %v1395 = vshrl.u32 %v1394, 7
    %v1396 = vsub.s32 %v1393, %v1395
    %v1397 = vrot.slane %v1368, %v1396
    %v1399 = vunpack.c.l.s4 1983009808
    %v1400 = vunpack.c.0.s8 %v1399
    %v1401 = vlaneseq
    %v1402 = vshrl.u32 %v1401, 7
    %v1403 = vsub.s32 %v1400, %v1402
    %v1404 = vrot.slane %v1390, %v1403
    %v1405 = vcombine.high %v1397, %v1397
    %v1406 = vcombine.high %v1404, %v1404
    %v1408 = vunpack.c.l.s4 1983009808
    %v1409 = vunpack.c.0.s8 %v1408
    %v1410 = vlaneseq
    %v1411 = vshrl.u32 %v1410, 7
    %v1412 = vsub.s32 %v1409, %v1411
    %v1413 = vrot.slane %v1369, %v1412
    %v1414 = vcombine.high %v1413, %v1413
    %vm1415 = vcmask 1044484
    %v1416 = vsel %vm1415, %v1380, %v1380
    %vm1417 = vcmask 1046534
    %v1418 = vsel %vm1417, %v1380, %v1416
    %v1419 = vrot.slane %v1405, 7
    %vm1420 = vcmask 1041409
    %v1421 = vsel %vm1420, %v1419, %v1418
    %vm1422 = vcmask 1043459
    %v1423 = vsel %vm1422, %v1419, %v1421
    %vm1424 = vcmask 1045509
    %v1425 = vsel %vm1424, %v1419, %v1423
    %vm1426 = vcmask 1047559
    %v1427 = vsel %vm1426, %v1419, %v1425
    %1429 = vst [vmem:[#allocation8] sm:$0x3] %v1427
    %v1430 = vrot.slane %v1380, 1
    %v1431 = vsel %vm1415, %v1430, %v1430
    %v1432 = vsel %vm1417, %v1430, %v1431
    %v1433 = vsel %vm1420, %v1405, %v1432
    %v1434 = vsel %vm1422, %v1405, %v1433
    %v1435 = vsel %vm1424, %v1405, %v1434
    %v1436 = vsel %vm1426, %v1405, %v1435
    %1438 = vst [vmem:[#allocation8 + $0x2] sm:$0x3] %v1436
    %v1439 = vsel %vm1415, %v1388, %v1388
    %v1440 = vsel %vm1417, %v1388, %v1439
    %v1441 = vrot.slane %v1404, 7
    %v1442 = vsel %vm1420, %v1441, %v1440
    %v1443 = vsel %vm1422, %v1441, %v1442
    %v1444 = vsel %vm1424, %v1441, %v1443
    %v1445 = vsel %vm1426, %v1441, %v1444
    %1447 = vst [vmem:[#allocation8 + $0x4] sm:$0x3] %v1445
    %v1448 = vrot.slane %v1388, 1
    %v1449 = vsel %vm1415, %v1448, %v1448
    %v1450 = vsel %vm1417, %v1448, %v1449
    %v1451 = vsel %vm1420, %v1404, %v1450
    %v1452 = vsel %vm1422, %v1404, %v1451
    %v1453 = vsel %vm1424, %v1404, %v1452
    %v1454 = vsel %vm1426, %v1404, %v1453
    %1456 = vst [vmem:[#allocation8 + $0x6] sm:$0x3] %v1454
    %v1457 = vsel %vm1415, %v1387, %v1387
    %v1458 = vsel %vm1417, %v1387, %v1457
    %v1459 = vrot.slane %v1406, 7
    %v1460 = vsel %vm1420, %v1459, %v1458
    %v1461 = vsel %vm1422, %v1459, %v1460
    %v1462 = vsel %vm1424, %v1459, %v1461
    %v1463 = vsel %vm1426, %v1459, %v1462
    %1465 = vst [vmem:[#allocation8 + $0x8] sm:$0x3] %v1463
    %v1466 = vrot.slane %v1387, 1
    %v1467 = vsel %vm1415, %v1466, %v1466
    %v1468 = vsel %vm1417, %v1466, %v1467
    %v1469 = vsel %vm1420, %v1406, %v1468
    %v1470 = vsel %vm1422, %v1406, %v1469
    %v1471 = vsel %vm1424, %v1406, %v1470
    %v1472 = vsel %vm1426, %v1406, %v1471
    %1474 = vst [vmem:[#allocation8 + $0xa] sm:$0x3] %v1472
    %v1475 = vsel %vm1415, %v1389, %v1389
    %v1476 = vsel %vm1417, %v1389, %v1475
    %v1477 = vrot.slane %v1413, 7
    %v1478 = vsel %vm1420, %v1477, %v1476
    %v1479 = vsel %vm1422, %v1477, %v1478
    %v1480 = vsel %vm1424, %v1477, %v1479
    %v1481 = vsel %vm1426, %v1477, %v1480
    %1483 = vst [vmem:[#allocation8 + $0xc] sm:$0x3] %v1481
    %v1484 = vrot.slane %v1389, 1
    %v1485 = vsel %vm1415, %v1484, %v1484
    %v1486 = vsel %vm1417, %v1484, %v1485
    %v1487 = vsel %vm1420, %v1413, %v1486
    %v1488 = vsel %vm1422, %v1413, %v1487
    %v1489 = vsel %vm1424, %v1413, %v1488
    %v1490 = vsel %vm1426, %v1413, %v1489
    %1492 = vst [vmem:[#allocation8 + $0xe] sm:$0x3] %v1490
    %v1493 = vsel %vm1415, %v1397, %v1397
    %v1494 = vsel %vm1417, %v1397, %v1493
    %v1495 = vrot.slane %v1414, 7
    %v1496 = vsel %vm1420, %v1495, %v1494
    %v1497 = vsel %vm1422, %v1495, %v1496
    %v1498 = vsel %vm1424, %v1495, %v1497
    %v1499 = vsel %vm1426, %v1495, %v1498
    %1501 = vst [vmem:[#allocation8 + $0x10] sm:$0x3] %v1499
    %v1502 = vrot.slane %v1397, 1
    %v1503 = vsel %vm1415, %v1502, %v1502
    %v1504 = vsel %vm1417, %v1502, %v1503
    %v1505 = vsel %vm1420, %v1414, %v1504
    %v1506 = vsel %vm1422, %v1414, %v1505
    %v1507 = vsel %vm1424, %v1414, %v1506
    %v1508 = vsel %vm1426, %v1414, %v1507
    %1510 = vst [vmem:[#allocation8 + $0x12] sm:$0x3] %v1508
    %v1511 = vld [vmem:[#allocation8] sm:$0xff]
    %v1512 = vld [vmem:[#allocation8 + $0x8] sm:$0xff]
    %v1513 = vld [vmem:[#allocation8 + $0x10] sm:$0xf]
    %v1514 = vld [vmem:[%s7] sm:$0xff]
    %v1515 = vld [vmem:[%s7 + $0x8] sm:$0xff]
    %v1516 = vld [vmem:[%s7 + $0x10] sm:$0xff]
    %v1517 = vld [vmem:[%s7 + $0x18] sm:$0xff]
    %v1518 = vld [vmem:[%s7 + $0x20] sm:$0xff]
    %v1519 = vld [vmem:[%s7 + $0x28] sm:$0xff]
    %v1520 = vld [vmem:[%s7 + $0x30] sm:$0xff]
    %v1521 = vld [vmem:[%s7 + $0x38] sm:$0xff]
    %v1522 = vld [vmem:[%s7 + $0x40] sm:$0xff]
    %v1523 = vld [vmem:[%s7 + $0x48] sm:$0xff]
    %v1524 = vld [vmem:[%s7 + $0x50] sm:$0xff]
    %v1525 = vld [vmem:[%s7 + $0x58] sm:$0xff]
    %v1526 = vld [vmem:[%s7 + $0x60] sm:$0xff]
    %v1527 = vld [vmem:[%s7 + $0x68] sm:$0xff]
    %v1528 = vld [vmem:[%s7 + $0x70] sm:$0xff]
    %v1529 = vld [vmem:[%s7 + $0x78] sm:$0xff]
    %v1530 = vld [vmem:[%s7 + $0x80] sm:$0xff]
    %v1531 = vld [vmem:[%s7 + $0x88] sm:$0xff]
    %v1532 = vld [vmem:[%s7 + $0x90] sm:$0xff]
    %v1533 = vld [vmem:[%s7 + $0x98] sm:$0xff]
    %v1534 = vld [vmem:[%s7 + $0xa0] sm:$0xff]
    %v1535 = vld [vmem:[%s7 + $0xa8] sm:$0xff]
    %v1536 = vld [vmem:[%s7 + $0xb0] sm:$0xff]
    %v1537 = vld [vmem:[%s7 + $0xb8] sm:$0xff]
    %v1538 = vld [vmem:[%s7 + $0xc0] sm:$0xff]
    %v1539 = vld [vmem:[%s7 + $0xc8] sm:$0xff]
    %v1540 = vld [vmem:[%s7 + $0xd0] sm:$0xff]
    %v1541 = vld [vmem:[%s7 + $0xd8] sm:$0xff]
    %v1542 = vld [vmem:[%s7 + $0xe0] sm:$0xff]
    %v1543 = vld [vmem:[%s7 + $0xe8] sm:$0xff]
    %v1544 = vld [vmem:[%s7 + $0xf0] sm:$0xff]
    %v1545 = vld [vmem:[%s7 + $0xf8] sm:$0xff]
    %v1546 = vld [vmem:[%s7 + $0x100] sm:$0xff]
    %v1547 = vld [vmem:[%s7 + $0x108] sm:$0xff]
    %v1548 = vld [vmem:[%s7 + $0x110] sm:$0xff]
    %v1549 = vld [vmem:[%s7 + $0x118] sm:$0xff]
    %v1550 = vld [vmem:[%s7 + $0x120] sm:$0xff]
    %v1551 = vld [vmem:[%s7 + $0x128] sm:$0xff]
    %v1552 = vld [vmem:[%s7 + $0x130] sm:$0xff]
    %v1553 = vld [vmem:[%s7 + $0x138] sm:$0xff]
    %v1554 = vld [vmem:[%s7 + $0x140] sm:$0xff]
    %v1555 = vld [vmem:[%s7 + $0x148] sm:$0xff]
    %v1556 = vld [vmem:[%s7 + $0x150] sm:$0xff]
    %v1557 = vld [vmem:[%s7 + $0x158] sm:$0xff]
    %v1558 = vld [vmem:[%s7 + $0x160] sm:$0xff]
    %v1559 = vld [vmem:[%s7 + $0x168] sm:$0xff]
    %v1560 = vld [vmem:[%s7 + $0x170] sm:$0xff]
    %v1561 = vld [vmem:[%s7 + $0x178] sm:$0xff]
    %v1562 = vld [vmem:[%s7 + $0x180] sm:$0xff]
    %v1563 = vld [vmem:[%s7 + $0x188] sm:$0xff]
    %v1564 = vld [vmem:[%s7 + $0x190] sm:$0xff]
    %v1565 = vld [vmem:[%s7 + $0x198] sm:$0xff]
    %v1566 = vld [vmem:[%s7 + $0x1a0] sm:$0xff]
    %v1567 = vld [vmem:[%s7 + $0x1a8] sm:$0xff]
    %v1568 = vld [vmem:[%s7 + $0x1b0] sm:$0xff]
    %v1569 = vld [vmem:[%s7 + $0x1b8] sm:$0xff]
    %v1570 = vld [vmem:[%s7 + $0x1c0] sm:$0xff]
    %v1571 = vld [vmem:[%s7 + $0x1c8] sm:$0xff]
    %v1572 = vld [vmem:[%s7 + $0x1d0] sm:$0xff]
    %v1573 = vld [vmem:[%s7 + $0x1d8] sm:$0xff]
    %v1574 = vld [vmem:[%s7 + $0x1e0] sm:$0xff]
    %v1575 = vld [vmem:[%s7 + $0x1e8] sm:$0xff]
    %v1576 = vld [vmem:[%s7 + $0x1f0] sm:$0xff]
    %v1577 = vld [vmem:[%s7 + $0x1f8] sm:$0xff]
    %v1578 = vld [vmem:[%s7 + $0x200] sm:$0xff]
    %v1579 = vld [vmem:[%s7 + $0x208] sm:$0xff]
    %v1580 = vld [vmem:[%s7 + $0x210] sm:$0xff]
    %v1581 = vld [vmem:[%s7 + $0x218] sm:$0xff]
    %v1582 = vld [vmem:[%s7 + $0x220] sm:$0xff]
    %v1583 = vld [vmem:[%s7 + $0x228] sm:$0xff]
    %v1584 = vld [vmem:[%s7 + $0x230] sm:$0xff]
    %v1585 = vld [vmem:[%s7 + $0x238] sm:$0xff]
    %v1586 = vld [vmem:[%s7 + $0x240] sm:$0xff]
    %v1587 = vld [vmem:[%s7 + $0x248] sm:$0xff]
    %v1588 = vld [vmem:[%s7 + $0x250] sm:$0xff]
    %v1589 = vld [vmem:[%s7 + $0x258] sm:$0xff]
    %v1590 = vld [vmem:[%s7 + $0x260] sm:$0xff]
    %v1591 = vld [vmem:[%s7 + $0x268] sm:$0xff]
    %v1592 = vld [vmem:[%s7 + $0x270] sm:$0xff]
    %v1593 = vld [vmem:[%s7 + $0x278] sm:$0xff]
    %v1594 = vld [vmem:[%s7 + $0x280] sm:$0xff]
    %v1595 = vld [vmem:[%s7 + $0x288] sm:$0xff]
    %v1596 = vld [vmem:[%s7 + $0x290] sm:$0xff]
    %v1597 = vld [vmem:[%s7 + $0x298] sm:$0xff]
    %v1598 = vld [vmem:[%s7 + $0x2a0] sm:$0xff]
    %v1599 = vld [vmem:[%s7 + $0x2a8] sm:$0xff]
    %v1600 = vld [vmem:[%s7 + $0x2b0] sm:$0xff]
    %v1601 = vld [vmem:[%s7 + $0x2b8] sm:$0xff]
    %v1602 = vld [vmem:[%s7 + $0x2c0] sm:$0xff]
    %v1603 = vld [vmem:[%s7 + $0x2c8] sm:$0xff]
    %v1604 = vld [vmem:[%s7 + $0x2d0] sm:$0xff]
    %v1605 = vld [vmem:[%s7 + $0x2d8] sm:$0xff]
    %v1606 = vld [vmem:[%s7 + $0x2e0] sm:$0xff]
    %v1607 = vld [vmem:[%s7 + $0x2e8] sm:$0xff]
    %v1608 = vld [vmem:[%s7 + $0x2f0] sm:$0xff]
    %v1609 = vld [vmem:[%s7 + $0x2f8] sm:$0xff]
    %v1610 = vld [vmem:[%s7 + $0x300] sm:$0xff]
    %v1611 = vld [vmem:[%s7 + $0x308] sm:$0xff]
    %v1612 = vld [vmem:[%s7 + $0x310] sm:$0xff]
    %v1613 = vld [vmem:[%s7 + $0x318] sm:$0xff]
    %v1614 = vld [vmem:[%s7 + $0x320] sm:$0xff]
    %v1615 = vld [vmem:[%s7 + $0x328] sm:$0xff]
    %v1616 = vld [vmem:[%s7 + $0x330] sm:$0xff]
    %v1617 = vld [vmem:[%s7 + $0x338] sm:$0xff]
    %v1618 = vld [vmem:[%s7 + $0x340] sm:$0xff]
    %v1619 = vld [vmem:[%s7 + $0x348] sm:$0xff]
    %v1620 = vld [vmem:[%s7 + $0x350] sm:$0xff]
    %v1621 = vld [vmem:[%s7 + $0x358] sm:$0xff]
    %v1622 = vld [vmem:[%s7 + $0x360] sm:$0xff]
    %v1623 = vld [vmem:[%s7 + $0x368] sm:$0xff]
    %v1624 = vld [vmem:[%s7 + $0x370] sm:$0xff]
    %v1625 = vld [vmem:[%s7 + $0x378] sm:$0xff]
    %v1626 = vld [vmem:[%s7 + $0x380] sm:$0xff]
    %v1627 = vld [vmem:[%s7 + $0x388] sm:$0xff]
    %v1628 = vld [vmem:[%s7 + $0x390] sm:$0xff]
    %v1629 = vld [vmem:[%s7 + $0x398] sm:$0xff]
    %v1630 = vld [vmem:[%s7 + $0x3a0] sm:$0xff]
    %v1631 = vld [vmem:[%s7 + $0x3a8] sm:$0xff]
    %v1632 = vld [vmem:[%s7 + $0x3b0] sm:$0xff]
    %v1633 = vld [vmem:[%s7 + $0x3b8] sm:$0xff]
    %v1634 = vld [vmem:[%s7 + $0x3c0] sm:$0xff]
    %v1635 = vld [vmem:[%s7 + $0x3c8] sm:$0xff]
    %v1636 = vld [vmem:[%s7 + $0x3d0] sm:$0xff]
    %v1637 = vld [vmem:[%s7 + $0x3d8] sm:$0xff]
    %v1638 = vld [vmem:[%s7 + $0x3e0] sm:$0xff]
    %v1639 = vld [vmem:[%s7 + $0x3e8] sm:$0xff]
    %v1640 = vld [vmem:[%s7 + $0x3f0] sm:$0xff]
    %v1641 = vld [vmem:[%s7 + $0x3f8] sm:$0xff]
    %v1642 = vld [vmem:[%s7 + $0x400] sm:$0xff]
    %v1643 = vld [vmem:[%s7 + $0x408] sm:$0xff]
    %v1644 = vld [vmem:[%s7 + $0x410] sm:$0xff]
    %v1645 = vld [vmem:[%s7 + $0x418] sm:$0xff]
    %v1646 = vld [vmem:[%s7 + $0x420] sm:$0xff]
    %v1647 = vld [vmem:[%s7 + $0x428] sm:$0xff]
    %v1648 = vld [vmem:[%s7 + $0x430] sm:$0xff]
    %v1649 = vld [vmem:[%s7 + $0x438] sm:$0xff]
    %v1650 = vld [vmem:[%s7 + $0x440] sm:$0xff]
    %v1651 = vld [vmem:[%s7 + $0x448] sm:$0xff]
    %v1652 = vld [vmem:[%s7 + $0x450] sm:$0xff]
    %v1653 = vld [vmem:[%s7 + $0x458] sm:$0xff]
    %v1654 = vld [vmem:[%s7 + $0x460] sm:$0xff]
    %v1655 = vld [vmem:[%s7 + $0x468] sm:$0xff]
    %v1656 = vld [vmem:[%s7 + $0x470] sm:$0xff]
    %v1657 = vld [vmem:[%s7 + $0x478] sm:$0xff]
    %v1658 = vld [vmem:[%s7 + $0x480] sm:$0xff]
    %v1659 = vld [vmem:[%s7 + $0x488] sm:$0xff]
    %v1660 = vld [vmem:[%s7 + $0x490] sm:$0xff]
    %v1661 = vld [vmem:[%s7 + $0x498] sm:$0xff]
    %v1662 = vld [vmem:[%s7 + $0x4a0] sm:$0xff]
    %v1663 = vld [vmem:[%s7 + $0x4a8] sm:$0xff]
    %v1664 = vld [vmem:[%s7 + $0x4b0] sm:$0xff]
    %v1665 = vld [vmem:[%s7 + $0x4b8] sm:$0xff]
    %v1666 = vld [vmem:[%s7 + $0x4c0] sm:$0xff]
    %v1667 = vld [vmem:[%s7 + $0x4c8] sm:$0xff]
    %v1668 = vld [vmem:[%s7 + $0x4d0] sm:$0xff]
    %v1669 = vld [vmem:[%s7 + $0x4d8] sm:$0xff]
    %v1670 = vld [vmem:[%s7 + $0x4e0] sm:$0xff]
    %v1671 = vld [vmem:[%s7 + $0x4e8] sm:$0xff]
    %v1672 = vld [vmem:[%s7 + $0x4f0] sm:$0xff]
    %v1673 = vld [vmem:[%s7 + $0x4f8] sm:$0xff]
    %v1674 = vld [vmem:[%s7 + $0x500] sm:$0xff]
    %v1675 = vld [vmem:[%s7 + $0x508] sm:$0xff]
    %v1676 = vld [vmem:[%s7 + $0x510] sm:$0xff]
    %v1677 = vld [vmem:[%s7 + $0x518] sm:$0xff]
    %v1678 = vld [vmem:[%s7 + $0x520] sm:$0xff]
    %v1679 = vld [vmem:[%s7 + $0x528] sm:$0xff]
    %v1680 = vld [vmem:[%s7 + $0x530] sm:$0xff]
    %v1681 = vld [vmem:[%s7 + $0x538] sm:$0xff]
    %v1682 = vld [vmem:[%s7 + $0x540] sm:$0xff]
    %v1683 = vld [vmem:[%s7 + $0x548] sm:$0xff]
    %v1684 = vld [vmem:[%s7 + $0x550] sm:$0xff]
    %v1685 = vld [vmem:[%s7 + $0x558] sm:$0xff]
    %v1686 = vld [vmem:[%s7 + $0x560] sm:$0xff]
    %v1687 = vld [vmem:[%s7 + $0x568] sm:$0xff]
    %v1688 = vld [vmem:[%s7 + $0x570] sm:$0xff]
    %v1689 = vld [vmem:[%s7 + $0x578] sm:$0xff]
    %v1690 = vld [vmem:[%s7 + $0x580] sm:$0xff]
    %v1691 = vld [vmem:[%s7 + $0x588] sm:$0xff]
    %v1692 = vld [vmem:[%s7 + $0x590] sm:$0xff]
    %v1693 = vld [vmem:[%s7 + $0x598] sm:$0xff]
    %v1694 = vld [vmem:[%s7 + $0x5a0] sm:$0xff]
    %v1695 = vld [vmem:[%s7 + $0x5a8] sm:$0xff]
    %v1696 = vld [vmem:[%s7 + $0x5b0] sm:$0xff]
    %v1697 = vld [vmem:[%s7 + $0x5b8] sm:$0xff]
    %v1698 = vld [vmem:[%s7 + $0x5c0] sm:$0xff]
    %v1699 = vld [vmem:[%s7 + $0x5c8] sm:$0xff]
    %v1700 = vld [vmem:[%s7 + $0x5d0] sm:$0xff]
    %v1701 = vld [vmem:[%s7 + $0x5d8] sm:$0xff]
    %v1702 = vld [vmem:[%s7 + $0x5e0] sm:$0xff]
    %v1703 = vld [vmem:[%s7 + $0x5e8] sm:$0xff]
    %v1704 = vld [vmem:[%s7 + $0x5f0] sm:$0xff]
    %v1705 = vld [vmem:[%s7 + $0x5f8] sm:$0xff]
    %v1706 = vld [vmem:[%s7 + $0x600] sm:$0xff]
    %v1707 = vld [vmem:[%s7 + $0x608] sm:$0xff]
    %v1708 = vld [vmem:[%s7 + $0x610] sm:$0xff]
    %v1709 = vld [vmem:[%s7 + $0x618] sm:$0xff]
    %v1710 = vld [vmem:[%s7 + $0x620] sm:$0xff]
    %v1711 = vld [vmem:[%s7 + $0x628] sm:$0xff]
    %v1712 = vld [vmem:[%s7 + $0x630] sm:$0xff]
    %v1713 = vld [vmem:[%s7 + $0x638] sm:$0xff]
    %v1714 = vld [vmem:[%s7 + $0x640] sm:$0xff]
    %v1715 = vld [vmem:[%s7 + $0x648] sm:$0xff]
    %v1716 = vld [vmem:[%s7 + $0x650] sm:$0xff]
    %v1717 = vld [vmem:[%s7 + $0x658] sm:$0xff]
    %v1718 = vld [vmem:[%s7 + $0x660] sm:$0xff]
    %v1719 = vld [vmem:[%s7 + $0x668] sm:$0xff]
    %v1720 = vld [vmem:[%s7 + $0x670] sm:$0xff]
    %v1721 = vld [vmem:[%s7 + $0x678] sm:$0xff]
    %v1722 = vld [vmem:[%s7 + $0x680] sm:$0xff]
    %v1723 = vld [vmem:[%s7 + $0x688] sm:$0xff]
    %v1724 = vld [vmem:[%s7 + $0x690] sm:$0xff]
    %v1725 = vld [vmem:[%s7 + $0x698] sm:$0xff]
    %v1726 = vld [vmem:[%s7 + $0x6a0] sm:$0xff]
    %v1727 = vld [vmem:[%s7 + $0x6a8] sm:$0xff]
    %v1728 = vld [vmem:[%s7 + $0x6b0] sm:$0xff]
    %v1729 = vld [vmem:[%s7 + $0x6b8] sm:$0xff]
    %v1730 = vld [vmem:[%s7 + $0x6c0] sm:$0xff]
    %v1731 = vld [vmem:[%s7 + $0x6c8] sm:$0xff]
    %v1732 = vld [vmem:[%s7 + $0x6d0] sm:$0xff]
    %v1733 = vld [vmem:[%s7 + $0x6d8] sm:$0xff]
    %v1734 = vld [vmem:[%s7 + $0x6e0] sm:$0xff]
    %v1735 = vld [vmem:[%s7 + $0x6e8] sm:$0xff]
    %v1736 = vld [vmem:[%s7 + $0x6f0] sm:$0xff]
    %v1737 = vld [vmem:[%s7 + $0x6f8] sm:$0xff]
    %v1738 = vld [vmem:[%s7 + $0x700] sm:$0xff]
    %v1739 = vld [vmem:[%s7 + $0x708] sm:$0xff]
    %v1740 = vld [vmem:[%s7 + $0x710] sm:$0xff]
    %v1741 = vld [vmem:[%s7 + $0x718] sm:$0xff]
    %v1742 = vld [vmem:[%s7 + $0x720] sm:$0xff]
    %v1743 = vld [vmem:[%s7 + $0x728] sm:$0xff]
    %v1744 = vld [vmem:[%s7 + $0x730] sm:$0xff]
    %v1745 = vld [vmem:[%s7 + $0x738] sm:$0xff]
    %v1746 = vld [vmem:[%s7 + $0x740] sm:$0xff]
    %v1747 = vld [vmem:[%s7 + $0x748] sm:$0xff]
    %v1748 = vld [vmem:[%s7 + $0x750] sm:$0xff]
    %v1749 = vld [vmem:[%s7 + $0x758] sm:$0xff]
    %v1750 = vld [vmem:[%s7 + $0x760] sm:$0xff]
    %v1751 = vld [vmem:[%s7 + $0x768] sm:$0xff]
    %v1752 = vld [vmem:[%s7 + $0x770] sm:$0xff]
    %v1753 = vld [vmem:[%s7 + $0x778] sm:$0xff]
    %v1754 = vld [vmem:[%s7 + $0x780] sm:$0xff]
    %v1755 = vld [vmem:[%s7 + $0x788] sm:$0xff]
    %v1756 = vld [vmem:[%s7 + $0x790] sm:$0xff]
    %v1757 = vld [vmem:[%s7 + $0x798] sm:$0xff]
    %v1758 = vld [vmem:[%s7 + $0x7a0] sm:$0xff]
    %v1759 = vld [vmem:[%s7 + $0x7a8] sm:$0xff]
    %v1760 = vld [vmem:[%s7 + $0x7b0] sm:$0xff]
    %v1761 = vld [vmem:[%s7 + $0x7b8] sm:$0xff]
    %v1762 = vld [vmem:[%s7 + $0x7c0] sm:$0xff]
    %v1763 = vld [vmem:[%s7 + $0x7c8] sm:$0xff]
    %v1764 = vld [vmem:[%s7 + $0x7d0] sm:$0xff]
    %v1765 = vld [vmem:[%s7 + $0x7d8] sm:$0xff]
    %v1766 = vld [vmem:[%s7 + $0x7e0] sm:$0xff]
    %v1767 = vld [vmem:[%s7 + $0x7e8] sm:$0xff]
    %v1768 = vld [vmem:[%s7 + $0x7f0] sm:$0xff]
    %v1769 = vld [vmem:[%s7 + $0x7f8] sm:$0xff]
    %v1770 = vld [vmem:[%s7 + $0x800] sm:$0xff]
    %v1771 = vld [vmem:[%s7 + $0x808] sm:$0xff]
    %v1772 = vld [vmem:[%s7 + $0x810] sm:$0xff]
    %v1773 = vld [vmem:[%s7 + $0x818] sm:$0xff]
    %v1774 = vld [vmem:[%s7 + $0x820] sm:$0xff]
    %v1775 = vld [vmem:[%s7 + $0x828] sm:$0xff]
    %v1776 = vld [vmem:[%s7 + $0x830] sm:$0xff]
    %v1777 = vld [vmem:[%s7 + $0x838] sm:$0xff]
    %v1778 = vld [vmem:[%s7 + $0x840] sm:$0xff]
    %v1779 = vld [vmem:[%s7 + $0x848] sm:$0xff]
    %v1780 = vld [vmem:[%s7 + $0x850] sm:$0xff]
    %v1781 = vld [vmem:[%s7 + $0x858] sm:$0xff]
    %v1782 = vld [vmem:[%s7 + $0x860] sm:$0xff]
    %v1783 = vld [vmem:[%s7 + $0x868] sm:$0xff]
    %v1784 = vld [vmem:[%s7 + $0x870] sm:$0xff]
    %v1785 = vld [vmem:[%s7 + $0x878] sm:$0xff]
    %v1786 = vld [vmem:[%s7 + $0x880] sm:$0xff]
    %v1787 = vld [vmem:[%s7 + $0x888] sm:$0xff]
    %v1788 = vld [vmem:[%s7 + $0x890] sm:$0xff]
    %v1789 = vld [vmem:[%s7 + $0x898] sm:$0xff]
    %v1790 = vld [vmem:[%s7 + $0x8a0] sm:$0xff]
    %v1791 = vld [vmem:[%s7 + $0x8a8] sm:$0xff]
    %v1792 = vld [vmem:[%s7 + $0x8b0] sm:$0xff]
    %v1793 = vld [vmem:[%s7 + $0x8b8] sm:$0xff]
    %v1794 = vld [vmem:[%s7 + $0x8c0] sm:$0xff]
    %v1795 = vld [vmem:[%s7 + $0x8c8] sm:$0xff]
    %v1796 = vld [vmem:[%s7 + $0x8d0] sm:$0xff]
    %v1797 = vld [vmem:[%s7 + $0x8d8] sm:$0xff]
    %v1798 = vld [vmem:[%s7 + $0x8e0] sm:$0xff]
    %v1799 = vld [vmem:[%s7 + $0x8e8] sm:$0xff]
    %v1800 = vld [vmem:[%s7 + $0x8f0] sm:$0xff]
    %v1801 = vld [vmem:[%s7 + $0x8f8] sm:$0xff]
    %v1802 = vld [vmem:[%s7 + $0x900] sm:$0xff]
    %v1803 = vld [vmem:[%s7 + $0x908] sm:$0xff]
    %v1804 = vld [vmem:[%s7 + $0x910] sm:$0xff]
    %v1805 = vld [vmem:[%s7 + $0x918] sm:$0xff]
    %v1806 = vld [vmem:[%s7 + $0x920] sm:$0xff]
    %v1807 = vld [vmem:[%s7 + $0x928] sm:$0xff]
    %v1808 = vld [vmem:[%s7 + $0x930] sm:$0xff]
    %v1809 = vld [vmem:[%s7 + $0x938] sm:$0xff]
    %v1810 = vld [vmem:[%s7 + $0x940] sm:$0xff]
    %v1811 = vld [vmem:[%s7 + $0x948] sm:$0xff]
    %v1812 = vld [vmem:[%s7 + $0x950] sm:$0xff]
    %v1813 = vld [vmem:[%s7 + $0x958] sm:$0xff]
    %v1814 = vld [vmem:[%s7 + $0x960] sm:$0xff]
    %v1815 = vld [vmem:[%s7 + $0x968] sm:$0xff]
    %v1816 = vld [vmem:[%s7 + $0x970] sm:$0xff]
    %v1817 = vld [vmem:[%s7 + $0x978] sm:$0xff]
    %v1818 = vld [vmem:[%s7 + $0x980] sm:$0xff]
    %v1819 = vld [vmem:[%s7 + $0x988] sm:$0xff]
    %v1820 = vld [vmem:[%s7 + $0x990] sm:$0xff]
    %v1821 = vld [vmem:[%s7 + $0x998] sm:$0xff]
    %v1822 = vld [vmem:[%s7 + $0x9a0] sm:$0xff]
    %v1823 = vld [vmem:[%s7 + $0x9a8] sm:$0xff]
    %v1824 = vld [vmem:[%s7 + $0x9b0] sm:$0xff]
    %v1825 = vld [vmem:[%s7 + $0x9b8] sm:$0xff]
    %v1826 = vld [vmem:[%s7 + $0x9c0] sm:$0xff]
    %v1827 = vld [vmem:[%s7 + $0x9c8] sm:$0xff]
    %v1828 = vld [vmem:[%s7 + $0x9d0] sm:$0xff]
    %v1829 = vld [vmem:[%s7 + $0x9d8] sm:$0xff]
    %v1830 = vld [vmem:[%s7 + $0x9e0] sm:$0xff]
    %v1831 = vld [vmem:[%s7 + $0x9e8] sm:$0xff]
    %v1832 = vld [vmem:[%s7 + $0x9f0] sm:$0xff]
    %v1833 = vld [vmem:[%s7 + $0x9f8] sm:$0xff]
    %v1834 = vld [vmem:[%s8] sm:$0x3]
    %v1836 = vlaneseq
    %v1837 = vshrl.u32 %v1836, 7
    %v1838 = vsub.s32 0, %v1837
    %v1839 = vrot.slane %v1834, %v1838
    %v1840 = vlaneseq
    %v1841 = vshrl.u32 %v1840, 7
    %v1842 = vsub.s32 1, %v1841
    %v1843 = vrot.slane %v1834, %v1842
    %v1849 = vcombine.high %v1511, %v1511
    %v1851 = vunpack.c.l.s4 1983009808
    %v1852 = vunpack.c.0.s8 %v1851
    %v1853 = vlaneseq
    %v1854 = vshrl.u32 %v1853, 7
    %v1855 = vsub.s32 %v1852, %v1854
    %v1856 = vrot.slane %v1511, %v1855
    %v1858 = vunpack.c.l.s4 1983009808
    %v1859 = vunpack.c.0.s8 %v1858
    %v1860 = vlaneseq
    %v1861 = vshrl.u32 %v1860, 7
    %v1862 = vsub.s32 %v1859, %v1861
    %v1863 = vrot.slane %v1849, %v1862
    %v1864 = vcombine.high %v1856, %v1856
    %v1865 = vcombine.high %v1863, %v1863
    %v1866 = vcombine.high %v1512, %v1512
    %v1868 = vunpack.c.l.s4 1983009808
    %v1869 = vunpack.c.0.s8 %v1868
    %v1870 = vlaneseq
    %v1871 = vshrl.u32 %v1870, 7
    %v1872 = vsub.s32 %v1869, %v1871
    %v1873 = vrot.slane %v1512, %v1872
    %v1875 = vunpack.c.l.s4 1983009808
    %v1876 = vunpack.c.0.s8 %v1875
    %v1877 = vlaneseq
    %v1878 = vshrl.u32 %v1877, 7
    %v1879 = vsub.s32 %v1876, %v1878
    %v1880 = vrot.slane %v1866, %v1879
    %v1881 = vcombine.high %v1873, %v1873
    %v1882 = vcombine.high %v1880, %v1880
    %v1884 = vunpack.c.l.s4 1983009808
    %v1885 = vunpack.c.0.s8 %v1884
    %v1886 = vlaneseq
    %v1887 = vshrl.u32 %v1886, 7
    %v1888 = vsub.s32 %v1885, %v1887
    %v1889 = vrot.slane %v1513, %v1888
    %v1890 = vcombine.high %v1889, %v1889
    %1901 = vmatprep.subr.mxu0 %v1545
    %1902 = vmatpush1.msra.mxu0 %v1544
    %1903 = vmatprep.subr.mxu0 %v1543
    %1904 = vmatpush1.msra.mxu0 %v1542
    %1905 = vmatprep.subr.mxu0 %v1541
    %1906 = vmatpush1.msra.mxu0 %v1540
    %1907 = vmatprep.subr.mxu0 %v1539
    %1908 = vmatpush1.msra.mxu0 %v1538
    %1909 = vmatprep.subr.mxu0 %v1537
    %1910 = vmatpush1.msra.mxu0 %v1536
    %1911 = vmatprep.subr.mxu0 %v1535
    %1912 = vmatpush1.msra.mxu0 %v1534
    %1913 = vmatprep.subr.mxu0 %v1533
    %1914 = vmatpush1.msra.mxu0 %v1532
    %1915 = vmatprep.subr.mxu0 %v1531
    %1916 = vmatpush1.msra.mxu0 %v1530
    %1917 = vmatprep.subr.mxu0 %v1529
    %1918 = vmatpush1.msra.mxu0 %v1528
    %1919 = vmatprep.subr.mxu0 %v1527
    %1920 = vmatpush1.msra.mxu0 %v1526
    %1921 = vmatprep.subr.mxu0 %v1525
    %1922 = vmatpush1.msra.mxu0 %v1524
    %1923 = vmatprep.subr.mxu0 %v1523
    %1924 = vmatpush1.msra.mxu0 %v1522
    %1925 = vmatprep.subr.mxu0 %v1521
    %1926 = vmatpush1.msra.mxu0 %v1520
    %1927 = vmatprep.subr.mxu0 %v1519
    %1928 = vmatpush1.msra.mxu0 %v1518
    %1929 = vmatprep.subr.mxu0 %v1517
    %1930 = vmatpush1.msra.mxu0 %v1516
    %1931 = vmatprep.subr.mxu0 %v1515
    %1932 = vmatpush1.msra.mxu0 %v1514
    %1933 = vmatprep.subr.mxu0 %v1577
    %1934 = vmatpush2.msra.mxu0 %v1576
    %1935 = vmatprep.subr.mxu0 %v1575
    %1936 = vmatpush2.msra.mxu0 %v1574
    %1937 = vmatprep.subr.mxu0 %v1573
    %1938 = vmatpush2.msra.mxu0 %v1572
    %1939 = vmatprep.subr.mxu0 %v1571
    %1940 = vmatpush2.msra.mxu0 %v1570
    %1941 = vmatprep.subr.mxu0 %v1569
    %1942 = vmatpush2.msra.mxu0 %v1568
    %1943 = vmatprep.subr.mxu0 %v1567
    %1944 = vmatpush2.msra.mxu0 %v1566
    %1945 = vmatprep.subr.mxu0 %v1565
    %1946 = vmatpush2.msra.mxu0 %v1564
    %1947 = vmatprep.subr.mxu0 %v1563
    %1948 = vmatpush2.msra.mxu0 %v1562
    %1949 = vmatprep.subr.mxu0 %v1561
    %1950 = vmatpush2.msra.mxu0 %v1560
    %1951 = vmatprep.subr.mxu0 %v1559
    %1952 = vmatpush2.msra.mxu0 %v1558
    %1953 = vmatprep.subr.mxu0 %v1557
    %1954 = vmatpush2.msra.mxu0 %v1556
    %1955 = vmatprep.subr.mxu0 %v1555
    %1956 = vmatpush2.msra.mxu0 %v1554
    %1957 = vmatprep.subr.mxu0 %v1553
    %1958 = vmatpush2.msra.mxu0 %v1552
    %1959 = vmatprep.subr.mxu0 %v1551
    %1960 = vmatpush2.msra.mxu0 %v1550
    %1961 = vmatprep.subr.mxu0 %v1549
    %1962 = vmatpush2.msra.mxu0 %v1548
    %1963 = vmatprep.subr.mxu0 %v1547
    %1964 = vmatpush2.msra.mxu0 %v1546
    %1965 = vmatprep.mubr.f32.mxu0 %v1864
    %1966 = vmatmul.mubr.f32.gmra.mxu0 %v1856
    %v1967 = vpop.f32.mrf.mxu0
    %v1968 = vadd.f32 %v1839, %v1967
    %v1969 = vpop.f32.mrf.mxu0
    %v1970 = vadd.f32 %v1843, %v1969
    %1971 = vdwg.mxu0
    %1972 = vmatprep.subr.mxu0 %v1609
    %1973 = vmatpush1.msra.mxu0 %v1608
    %1974 = vmatprep.subr.mxu0 %v1607
    %1975 = vmatpush1.msra.mxu0 %v1606
    %1976 = vmatprep.subr.mxu0 %v1605
    %1977 = vmatpush1.msra.mxu0 %v1604
    %1978 = vmatprep.subr.mxu0 %v1603
    %1979 = vmatpush1.msra.mxu0 %v1602
    %1980 = vmatprep.subr.mxu0 %v1601
    %1981 = vmatpush1.msra.mxu0 %v1600
    %1982 = vmatprep.subr.mxu0 %v1599
    %1983 = vmatpush1.msra.mxu0 %v1598
    %1984 = vmatprep.subr.mxu0 %v1597
    %1985 = vmatpush1.msra.mxu0 %v1596
    %1986 = vmatprep.subr.mxu0 %v1595
    %1987 = vmatpush1.msra.mxu0 %v1594
    %1988 = vmatprep.subr.mxu0 %v1593
    %1989 = vmatpush1.msra.mxu0 %v1592
    %1990 = vmatprep.subr.mxu0 %v1591
    %1991 = vmatpush1.msra.mxu0 %v1590
    %1992 = vmatprep.subr.mxu0 %v1589
    %1993 = vmatpush1.msra.mxu0 %v1588
    %1994 = vmatprep.subr.mxu0 %v1587
    %1995 = vmatpush1.msra.mxu0 %v1586
    %1996 = vmatprep.subr.mxu0 %v1585
    %1997 = vmatpush1.msra.mxu0 %v1584
    %1998 = vmatprep.subr.mxu0 %v1583
    %1999 = vmatpush1.msra.mxu0 %v1582
    %2000 = vmatprep.subr.mxu0 %v1581
    %2001 = vmatpush1.msra.mxu0 %v1580
    %2002 = vmatprep.subr.mxu0 %v1579
    %2003 = vmatpush1.msra.mxu0 %v1578
    %2004 = vmatprep.subr.mxu0 %v1641
    %2005 = vmatpush2.msra.mxu0 %v1640
    %2006 = vmatprep.subr.mxu0 %v1639
    %2007 = vmatpush2.msra.mxu0 %v1638
    %2008 = vmatprep.subr.mxu0 %v1637
    %2009 = vmatpush2.msra.mxu0 %v1636
    %2010 = vmatprep.subr.mxu0 %v1635
    %2011 = vmatpush2.msra.mxu0 %v1634
    %2012 = vmatprep.subr.mxu0 %v1633
    %2013 = vmatpush2.msra.mxu0 %v1632
    %2014 = vmatprep.subr.mxu0 %v1631
    %2015 = vmatpush2.msra.mxu0 %v1630
    %2016 = vmatprep.subr.mxu0 %v1629
    %2017 = vmatpush2.msra.mxu0 %v1628
    %2018 = vmatprep.subr.mxu0 %v1627
    %2019 = vmatpush2.msra.mxu0 %v1626
    %2020 = vmatprep.subr.mxu0 %v1625
    %2021 = vmatpush2.msra.mxu0 %v1624
    %2022 = vmatprep.subr.mxu0 %v1623
    %2023 = vmatpush2.msra.mxu0 %v1622
    %2024 = vmatprep.subr.mxu0 %v1621
    %2025 = vmatpush2.msra.mxu0 %v1620
    %2026 = vmatprep.subr.mxu0 %v1619
    %2027 = vmatpush2.msra.mxu0 %v1618
    %2028 = vmatprep.subr.mxu0 %v1617
    %2029 = vmatpush2.msra.mxu0 %v1616
    %2030 = vmatprep.subr.mxu0 %v1615
    %2031 = vmatpush2.msra.mxu0 %v1614
    %2032 = vmatprep.subr.mxu0 %v1613
    %2033 = vmatpush2.msra.mxu0 %v1612
    %2034 = vmatprep.subr.mxu0 %v1611
    %2035 = vmatpush2.msra.mxu0 %v1610
    %2036 = vmatprep.mubr.f32.mxu0 %v1865
    %2037 = vmatmul.mubr.f32.gmra.mxu0 %v1863
    %v2038 = vpop.f32.mrf.mxu0
    %v2039 = vadd.f32 %v1968, %v2038
    %v2040 = vpop.f32.mrf.mxu0
    %v2041 = vadd.f32 %v1970, %v2040
    %2042 = vdwg.mxu0
    %2043 = vmatprep.subr.mxu0 %v1673
    %2044 = vmatpush1.msra.mxu0 %v1672
    %2045 = vmatprep.subr.mxu0 %v1671
    %2046 = vmatpush1.msra.mxu0 %v1670
    %2047 = vmatprep.subr.mxu0 %v1669
    %2048 = vmatpush1.msra.mxu0 %v1668
    %2049 = vmatprep.subr.mxu0 %v1667
    %2050 = vmatpush1.msra.mxu0 %v1666
    %2051 = vmatprep.subr.mxu0 %v1665
    %2052 = vmatpush1.msra.mxu0 %v1664
    %2053 = vmatprep.subr.mxu0 %v1663
    %2054 = vmatpush1.msra.mxu0 %v1662
    %2055 = vmatprep.subr.mxu0 %v1661
    %2056 = vmatpush1.msra.mxu0 %v1660
    %2057 = vmatprep.subr.mxu0 %v1659
    %2058 = vmatpush1.msra.mxu0 %v1658
    %2059 = vmatprep.subr.mxu0 %v1657
    %2060 = vmatpush1.msra.mxu0 %v1656
    %2061 = vmatprep.subr.mxu0 %v1655
    %2062 = vmatpush1.msra.mxu0 %v1654
    %2063 = vmatprep.subr.mxu0 %v1653
    %2064 = vmatpush1.msra.mxu0 %v1652
    %2065 = vmatprep.subr.mxu0 %v1651
    %2066 = vmatpush1.msra.mxu0 %v1650
    %2067 = vmatprep.subr.mxu0 %v1649
    %2068 = vmatpush1.msra.mxu0 %v1648
    %2069 = vmatprep.subr.mxu0 %v1647
    %2070 = vmatpush1.msra.mxu0 %v1646
    %2071 = vmatprep.subr.mxu0 %v1645
    %2072 = vmatpush1.msra.mxu0 %v1644
    %2073 = vmatprep.subr.mxu0 %v1643
    %2074 = vmatpush1.msra.mxu0 %v1642
    %2075 = vmatprep.subr.mxu0 %v1705
    %2076 = vmatpush2.msra.mxu0 %v1704
    %2077 = vmatprep.subr.mxu0 %v1703
    %2078 = vmatpush2.msra.mxu0 %v1702
    %2079 = vmatprep.subr.mxu0 %v1701
    %2080 = vmatpush2.msra.mxu0 %v1700
    %2081 = vmatprep.subr.mxu0 %v1699
    %2082 = vmatpush2.msra.mxu0 %v1698
    %2083 = vmatprep.subr.mxu0 %v1697
    %2084 = vmatpush2.msra.mxu0 %v1696
    %2085 = vmatprep.subr.mxu0 %v1695
    %2086 = vmatpush2.msra.mxu0 %v1694
    %2087 = vmatprep.subr.mxu0 %v1693
    %2088 = vmatpush2.msra.mxu0 %v1692
    %2089 = vmatprep.subr.mxu0 %v1691
    %2090 = vmatpush2.msra.mxu0 %v1690
    %2091 = vmatprep.subr.mxu0 %v1689
    %2092 = vmatpush2.msra.mxu0 %v1688
    %2093 = vmatprep.subr.mxu0 %v1687
    %2094 = vmatpush2.msra.mxu0 %v1686
    %2095 = vmatprep.subr.mxu0 %v1685
    %2096 = vmatpush2.msra.mxu0 %v1684
    %2097 = vmatprep.subr.mxu0 %v1683
    %2098 = vmatpush2.msra.mxu0 %v1682
    %2099 = vmatprep.subr.mxu0 %v1681
    %2100 = vmatpush2.msra.mxu0 %v1680
    %2101 = vmatprep.subr.mxu0 %v1679
    %2102 = vmatpush2.msra.mxu0 %v1678
    %2103 = vmatprep.subr.mxu0 %v1677
    %2104 = vmatpush2.msra.mxu0 %v1676
    %2105 = vmatprep.subr.mxu0 %v1675
    %2106 = vmatpush2.msra.mxu0 %v1674
    %2107 = vmatprep.mubr.f32.mxu0 %v1881
    %2108 = vmatmul.mubr.f32.gmra.mxu0 %v1873
    %v2109 = vpop.f32.mrf.mxu0
    %v2110 = vadd.f32 %v2039, %v2109
    %v2111 = vpop.f32.mrf.mxu0
    %v2112 = vadd.f32 %v2041, %v2111
    %2113 = vdwg.mxu0
    %2114 = vmatprep.subr.mxu0 %v1737
    %2115 = vmatpush1.msra.mxu0 %v1736
    %2116 = vmatprep.subr.mxu0 %v1735
    %2117 = vmatpush1.msra.mxu0 %v1734
    %2118 = vmatprep.subr.mxu0 %v1733
    %2119 = vmatpush1.msra.mxu0 %v1732
    %2120 = vmatprep.subr.mxu0 %v1731
    %2121 = vmatpush1.msra.mxu0 %v1730
    %2122 = vmatprep.subr.mxu0 %v1729
    %2123 = vmatpush1.msra.mxu0 %v1728
    %2124 = vmatprep.subr.mxu0 %v1727
    %2125 = vmatpush1.msra.mxu0 %v1726
    %2126 = vmatprep.subr.mxu0 %v1725
    %2127 = vmatpush1.msra.mxu0 %v1724
    %2128 = vmatprep.subr.mxu0 %v1723
    %2129 = vmatpush1.msra.mxu0 %v1722
    %2130 = vmatprep.subr.mxu0 %v1721
    %2131 = vmatpush1.msra.mxu0 %v1720
    %2132 = vmatprep.subr.mxu0 %v1719
    %2133 = vmatpush1.msra.mxu0 %v1718
    %2134 = vmatprep.subr.mxu0 %v1717
    %2135 = vmatpush1.msra.mxu0 %v1716
    %2136 = vmatprep.subr.mxu0 %v1715
    %2137 = vmatpush1.msra.mxu0 %v1714
    %2138 = vmatprep.subr.mxu0 %v1713
    %2139 = vmatpush1.msra.mxu0 %v1712
    %2140 = vmatprep.subr.mxu0 %v1711
    %2141 = vmatpush1.msra.mxu0 %v1710
    %2142 = vmatprep.subr.mxu0 %v1709
    %2143 = vmatpush1.msra.mxu0 %v1708
    %2144 = vmatprep.subr.mxu0 %v1707
    %2145 = vmatpush1.msra.mxu0 %v1706
    %2146 = vmatprep.subr.mxu0 %v1769
    %2147 = vmatpush2.msra.mxu0 %v1768
    %2148 = vmatprep.subr.mxu0 %v1767
    %2149 = vmatpush2.msra.mxu0 %v1766
    %2150 = vmatprep.subr.mxu0 %v1765
    %2151 = vmatpush2.msra.mxu0 %v1764
    %2152 = vmatprep.subr.mxu0 %v1763
    %2153 = vmatpush2.msra.mxu0 %v1762
    %2154 = vmatprep.subr.mxu0 %v1761
    %2155 = vmatpush2.msra.mxu0 %v1760
    %2156 = vmatprep.subr.mxu0 %v1759
    %2157 = vmatpush2.msra.mxu0 %v1758
    %2158 = vmatprep.subr.mxu0 %v1757
    %2159 = vmatpush2.msra.mxu0 %v1756
    %2160 = vmatprep.subr.mxu0 %v1755
    %2161 = vmatpush2.msra.mxu0 %v1754
    %2162 = vmatprep.subr.mxu0 %v1753
    %2163 = vmatpush2.msra.mxu0 %v1752
    %2164 = vmatprep.subr.mxu0 %v1751
    %2165 = vmatpush2.msra.mxu0 %v1750
    %2166 = vmatprep.subr.mxu0 %v1749
    %2167 = vmatpush2.msra.mxu0 %v1748
    %2168 = vmatprep.subr.mxu0 %v1747
    %2169 = vmatpush2.msra.mxu0 %v1746
    %2170 = vmatprep.subr.mxu0 %v1745
    %2171 = vmatpush2.msra.mxu0 %v1744
    %2172 = vmatprep.subr.mxu0 %v1743
    %2173 = vmatpush2.msra.mxu0 %v1742
    %2174 = vmatprep.subr.mxu0 %v1741
    %2175 = vmatpush2.msra.mxu0 %v1740
    %2176 = vmatprep.subr.mxu0 %v1739
    %2177 = vmatpush2.msra.mxu0 %v1738
    %2178 = vmatprep.mubr.f32.mxu0 %v1882
    %2179 = vmatmul.mubr.f32.gmra.mxu0 %v1880
    %v2180 = vpop.f32.mrf.mxu0
    %v2181 = vadd.f32 %v2110, %v2180
    %v2182 = vpop.f32.mrf.mxu0
    %v2183 = vadd.f32 %v2112, %v2182
    %2184 = vdwg.mxu0
    %2185 = vmatprep.subr.mxu0 %v1801
    %2186 = vmatpush1.msra.mxu0 %v1800
    %2187 = vmatprep.subr.mxu0 %v1799
    %2188 = vmatpush1.msra.mxu0 %v1798
    %2189 = vmatprep.subr.mxu0 %v1797
    %2190 = vmatpush1.msra.mxu0 %v1796
    %2191 = vmatprep.subr.mxu0 %v1795
    %2192 = vmatpush1.msra.mxu0 %v1794
    %2193 = vmatprep.subr.mxu0 %v1793
    %2194 = vmatpush1.msra.mxu0 %v1792
    %2195 = vmatprep.subr.mxu0 %v1791
    %2196 = vmatpush1.msra.mxu0 %v1790
    %2197 = vmatprep.subr.mxu0 %v1789
    %2198 = vmatpush1.msra.mxu0 %v1788
    %2199 = vmatprep.subr.mxu0 %v1787
    %2200 = vmatpush1.msra.mxu0 %v1786
    %2201 = vmatprep.subr.mxu0 %v1785
    %2202 = vmatpush1.msra.mxu0 %v1784
    %2203 = vmatprep.subr.mxu0 %v1783
    %2204 = vmatpush1.msra.mxu0 %v1782
    %2205 = vmatprep.subr.mxu0 %v1781
    %2206 = vmatpush1.msra.mxu0 %v1780
    %2207 = vmatprep.subr.mxu0 %v1779
    %2208 = vmatpush1.msra.mxu0 %v1778
    %2209 = vmatprep.subr.mxu0 %v1777
    %2210 = vmatpush1.msra.mxu0 %v1776
    %2211 = vmatprep.subr.mxu0 %v1775
    %2212 = vmatpush1.msra.mxu0 %v1774
    %2213 = vmatprep.subr.mxu0 %v1773
    %2214 = vmatpush1.msra.mxu0 %v1772
    %2215 = vmatprep.subr.mxu0 %v1771
    %2216 = vmatpush1.msra.mxu0 %v1770
    %2217 = vmatprep.subr.mxu0 %v1833
    %2218 = vmatpush2.msra.mxu0 %v1832
    %2219 = vmatprep.subr.mxu0 %v1831
    %2220 = vmatpush2.msra.mxu0 %v1830
    %2221 = vmatprep.subr.mxu0 %v1829
    %2222 = vmatpush2.msra.mxu0 %v1828
    %2223 = vmatprep.subr.mxu0 %v1827
    %2224 = vmatpush2.msra.mxu0 %v1826
    %2225 = vmatprep.subr.mxu0 %v1825
    %2226 = vmatpush2.msra.mxu0 %v1824
    %2227 = vmatprep.subr.mxu0 %v1823
    %2228 = vmatpush2.msra.mxu0 %v1822
    %2229 = vmatprep.subr.mxu0 %v1821
    %2230 = vmatpush2.msra.mxu0 %v1820
    %2231 = vmatprep.subr.mxu0 %v1819
    %2232 = vmatpush2.msra.mxu0 %v1818
    %2233 = vmatprep.subr.mxu0 %v1817
    %2234 = vmatpush2.msra.mxu0 %v1816
    %2235 = vmatprep.subr.mxu0 %v1815
    %2236 = vmatpush2.msra.mxu0 %v1814
    %2237 = vmatprep.subr.mxu0 %v1813
    %2238 = vmatpush2.msra.mxu0 %v1812
    %2239 = vmatprep.subr.mxu0 %v1811
    %2240 = vmatpush2.msra.mxu0 %v1810
    %2241 = vmatprep.subr.mxu0 %v1809
    %2242 = vmatpush2.msra.mxu0 %v1808
    %2243 = vmatprep.subr.mxu0 %v1807
    %2244 = vmatpush2.msra.mxu0 %v1806
    %2245 = vmatprep.subr.mxu0 %v1805
    %2246 = vmatpush2.msra.mxu0 %v1804
    %2247 = vmatprep.subr.mxu0 %v1803
    %2248 = vmatpush2.msra.mxu0 %v1802
    %2249 = vmatprep.mubr.f32.mxu0 %v1890
    %2250 = vmatmul.mubr.f32.gmra.mxu0 %v1889
    %v2251 = vpop.f32.mrf.mxu0
    %v2252 = vadd.f32 %v2181, %v2251
    %v2253 = vpop.f32.mrf.mxu0
    %v2254 = vadd.f32 %v2183, %v2253
    %2255 = vdwg.mxu0
    %v2256 = vmax.f32 %v2252, 0.0
    %v2257 = vmax.f32 %v2254, 0.0
    %v2258 = vld [vmem:[%s9] sm:$0xff]
    %v2259 = vld [vmem:[%s9 + $0x8] sm:$0xff]
    %v2260 = vld [vmem:[%s9 + $0x10] sm:$0xff]
    %v2261 = vld [vmem:[%s9 + $0x18] sm:$0xff]
    %v2262 = vld [vmem:[%s9 + $0x20] sm:$0xff]
    %v2263 = vld [vmem:[%s9 + $0x28] sm:$0xff]
    %v2264 = vld [vmem:[%s9 + $0x30] sm:$0xff]
    %v2265 = vld [vmem:[%s9 + $0x38] sm:$0xff]
    %v2266 = vld [vmem:[%s9 + $0x40] sm:$0xff]
    %v2267 = vld [vmem:[%s9 + $0x48] sm:$0xff]
    %v2268 = vld [vmem:[%s9 + $0x50] sm:$0xff]
    %v2269 = vld [vmem:[%s9 + $0x58] sm:$0xff]
    %v2270 = vld [vmem:[%s9 + $0x60] sm:$0xff]
    %v2271 = vld [vmem:[%s9 + $0x68] sm:$0xff]
    %v2272 = vld [vmem:[%s9 + $0x70] sm:$0xff]
    %v2273 = vld [vmem:[%s9 + $0x78] sm:$0xff]
    %v2274 = vld [vmem:[%s9 + $0x80] sm:$0xff]
    %v2275 = vld [vmem:[%s9 + $0x88] sm:$0xff]
    %v2276 = vld [vmem:[%s9 + $0x90] sm:$0xff]
    %v2277 = vld [vmem:[%s9 + $0x98] sm:$0xff]
    %v2278 = vld [vmem:[%s9 + $0xa0] sm:$0xff]
    %v2279 = vld [vmem:[%s9 + $0xa8] sm:$0xff]
    %v2280 = vld [vmem:[%s9 + $0xb0] sm:$0xff]
    %v2281 = vld [vmem:[%s9 + $0xb8] sm:$0xff]
    %v2282 = vld [vmem:[%s9 + $0xc0] sm:$0xff]
    %v2283 = vld [vmem:[%s9 + $0xc8] sm:$0xff]
    %v2284 = vld [vmem:[%s9 + $0xd0] sm:$0xff]
    %v2285 = vld [vmem:[%s9 + $0xd8] sm:$0xff]
    %v2286 = vld [vmem:[%s9 + $0xe0] sm:$0xff]
    %v2287 = vld [vmem:[%s9 + $0xe8] sm:$0xff]
    %v2288 = vld [vmem:[%s9 + $0xf0] sm:$0xff]
    %v2289 = vld [vmem:[%s9 + $0xf8] sm:$0xff]
    %v2290 = vld [vmem:[%s10] sm:$0x1]
    %v2292 = vlaneseq
    %v2293 = vshrl.u32 %v2292, 7
    %v2294 = vsub.s32 0, %v2293
    %v2295 = vrot.slane %v2290, %v2294
    %2297 = vmatprep.subr.mxu0 0.0
    %2298 = vmatpush1.msra.mxu0 %v2273
    %2299 = vmatprep.subr.mxu0 0.0
    %2300 = vmatpush1.msra.mxu0 %v2272
    %2301 = vmatprep.subr.mxu0 0.0
    %2302 = vmatpush1.msra.mxu0 %v2271
    %2303 = vmatprep.subr.mxu0 0.0
    %2304 = vmatpush1.msra.mxu0 %v2270
    %2305 = vmatprep.subr.mxu0 0.0
    %2306 = vmatpush1.msra.mxu0 %v2269
    %2307 = vmatprep.subr.mxu0 0.0
    %2308 = vmatpush1.msra.mxu0 %v2268
    %2309 = vmatprep.subr.mxu0 0.0
    %2310 = vmatpush1.msra.mxu0 %v2267
    %2311 = vmatprep.subr.mxu0 0.0
    %2312 = vmatpush1.msra.mxu0 %v2266
    %2313 = vmatprep.subr.mxu0 0.0
    %2314 = vmatpush1.msra.mxu0 %v2265
    %2315 = vmatprep.subr.mxu0 0.0
    %2316 = vmatpush1.msra.mxu0 %v2264
    %2317 = vmatprep.subr.mxu0 0.0
    %2318 = vmatpush1.msra.mxu0 %v2263
    %2319 = vmatprep.subr.mxu0 0.0
    %2320 = vmatpush1.msra.mxu0 %v2262
    %2321 = vmatprep.subr.mxu0 0.0
    %2322 = vmatpush1.msra.mxu0 %v2261
    %2323 = vmatprep.subr.mxu0 0.0
    %2324 = vmatpush1.msra.mxu0 %v2260
    %2325 = vmatprep.subr.mxu0 0.0
    %2326 = vmatpush1.msra.mxu0 %v2259
    %2327 = vmatprep.subr.mxu0 0.0
    %2328 = vmatpush1.msra.mxu0 %v2258
    %2329 = vmatprep.subr.mxu0 0.0
    %2330 = vmatpush2.msra.mxu0 %v2289
    %2331 = vmatprep.subr.mxu0 0.0
    %2332 = vmatpush2.msra.mxu0 %v2288
    %2333 = vmatprep.subr.mxu0 0.0
    %2334 = vmatpush2.msra.mxu0 %v2287
    %2335 = vmatprep.subr.mxu0 0.0
    %2336 = vmatpush2.msra.mxu0 %v2286
    %2337 = vmatprep.subr.mxu0 0.0
    %2338 = vmatpush2.msra.mxu0 %v2285
    %2339 = vmatprep.subr.mxu0 0.0
    %2340 = vmatpush2.msra.mxu0 %v2284
    %2341 = vmatprep.subr.mxu0 0.0
    %2342 = vmatpush2.msra.mxu0 %v2283
    %2343 = vmatprep.subr.mxu0 0.0
    %2344 = vmatpush2.msra.mxu0 %v2282
    %2345 = vmatprep.subr.mxu0 0.0
    %2346 = vmatpush2.msra.mxu0 %v2281
    %2347 = vmatprep.subr.mxu0 0.0
    %2348 = vmatpush2.msra.mxu0 %v2280
    %2349 = vmatprep.subr.mxu0 0.0
    %2350 = vmatpush2.msra.mxu0 %v2279
    %2351 = vmatprep.subr.mxu0 0.0
    %2352 = vmatpush2.msra.mxu0 %v2278
    %2353 = vmatprep.subr.mxu0 0.0
    %2354 = vmatpush2.msra.mxu0 %v2277
    %2355 = vmatprep.subr.mxu0 0.0
    %2356 = vmatpush2.msra.mxu0 %v2276
    %2357 = vmatprep.subr.mxu0 0.0
    %2358 = vmatpush2.msra.mxu0 %v2275
    %2359 = vmatprep.subr.mxu0 0.0
    %2360 = vmatpush2.msra.mxu0 %v2274
    %2361 = vmatprep.mubr.f32.mxu0 %v2257
    %2362 = vmatmul.mubr.f32.gmra.mxu0 %v2256
    %v2363 = vpop.f32.mrf.mxu0
    %v2364 = vadd.f32 %v2295, %v2363
    %v2365 = vpop.f32.mrf.mxu0
    %2366 = vdwg.mxu0
    %vm2367 = vcmask 132096
    %2368 = vst.msk [vmem:[#allocation9] sm:$0x3] %vm2367, %v2364
    // Predicated region
    $region46: #{pallas_forward.1} parent=1 // pred_check
      _
    $region47: #{pallas_forward.1} parent=1 // pred_check_branch
      %2370 = sbr.rel (0) target = $region49
    $region48: #{pallas_forward.1} parent=1 // pred_region
      %s2372 = ssub.s32 32, 32
      %2373 = vsyncadd [#allocation10], %s2372
      %s2375 = sshll.u32 [#allocation9], 4
      %s2376 = int_to_ptr.vmem [resolvable:$true] %s2375
      %2378 = dma.vmem_to_hbm [thread:$0]  %s2376, 32, %s11, [#allocation10]
    $region49: #{pallas_forward.1} parent=1 // pred_fallthru
      _
    // Predicated region
    $region50: #{pallas_forward.1} parent=1 // pred_check
      _
    $region51: #{pallas_forward.1} parent=1 // pred_check_branch
      %2380 = sbr.rel (0) target = $region53
    $region52: #{pallas_forward.1} parent=1 // pred_region
      %2381 = dma.done [#allocation10], 32
    $region53: #{pallas_forward.1} parent=1 // pred_fallthru
      _
    %2382 = vsyncpa [#allocation10], 1

</llo_original>
